<compile_context>
chip_gen: v6e
topology: v6e:2x2x1
jax: 0.10.0
libtpu: 0.0.40
codegen_flags: <defaults>
</compile_context>

<pallas_src>
import jax
import jax.numpy as jnp
from jax.experimental import pallas as pl
from jax.experimental.pallas import tpu as pltpu


# --------------------------------------------------------------------------- #
# Kernel
# --------------------------------------------------------------------------- #
def _write_cols(xcol_ref, rows, v, aligned):
    """Write the three column-offset copies of v (R, W, C) into xcol[rows].

    xcol[rows, x, off*C:(off+1)*C] = xpad[rows, x + off]  for off in {0,1,2},
    where xpad is the width-zero-padded row (pad=1 on each side).
    """
    R, W, C = v.shape
    z = jnp.zeros((R, 1, C), v.dtype)
    left = jnp.concatenate([z, v[:, :W - 1, :]], axis=1)   # off = 0
    right = jnp.concatenate([v[:, 1:, :], z], axis=1)      # off = 2
    if aligned:
        # C is a multiple of 128: lane-aligned per-offset stores (3 passes).
        xcol_ref[rows, :, 0:C] = left
        xcol_ref[rows, :, C:2 * C] = v
        xcol_ref[rows, :, 2 * C:3 * C] = right
    else:
        # Small / unaligned C: build the 3C-wide value and store once.
        xcol_ref[rows, :, :] = jnp.concatenate([left, v, right], axis=-1)


def _upsample_kernel(xm_ref, xt_ref, xb_ref, w_ref, b_ref, o_ref, xcol_ref):
    """One (batch n, row-tile i) grid step.

    xm_ref  : (1, tile_h, W, C)        main input row tile
    xt_ref  : (1, 1, W, C)             row above the tile (clamped)
    xb_ref  : (1, 1, W, C)             row below the tile (clamped)
    w_ref   : (2, 2, 3*C, 2*Cout)      [ry, dy] rx+column-tap fused weights
    b_ref   : (1, 2*Cout)              bias tiled for both rx phases
    o_ref   : (1, tile_h, 2, W, 2*Cout)  flat layout == NHWC (2H, 2W, Cout)
    xcol_ref: (tile_h+2, W, 3*C)       three column-offset copies, halo rows incl.
    """
    tH, W, C = xm_ref.shape[1], xm_ref.shape[2], xm_ref.shape[3]
    Co2 = o_ref.shape[4]
    aligned = (C % 128 == 0)

    i = pl.program_id(1)
    last = pl.num_programs(1) - 1
    cdt = xcol_ref.dtype

    # Halo validity (image boundary rows are zero-padded) as a 0/1 multiply.
    vt = (i > 0).astype(cdt)
    vb = (i < last).astype(cdt)

    # Build the column-offset staging buffer: rows 1..tH = tile, 0 / tH+1 = halos.
    _write_cols(xcol_ref, slice(1, tH + 1), xm_ref[0].astype(cdt), aligned)
    _write_cols(xcol_ref, slice(0, 1), xt_ref[0].astype(cdt) * vt, aligned)
    _write_cols(xcol_ref, slice(tH + 1, tH + 2), xb_ref[0].astype(cdt) * vb, aligned)

    bias2d = b_ref[...].astype(jnp.float32)            # (1, 2*Cout), hoisted

    for ry in range(2):
        # dy row taps are free leading-dim slices of the staging buffer.
        x0 = xcol_ref[ry:ry + tH].reshape(tH * W, 3 * C)
        x1 = xcol_ref[ry + 1:ry + 1 + tH].reshape(tH * W, 3 * C)
        y = jnp.dot(x0, w_ref[ry, 0], preferred_element_type=jnp.float32)
        y = y + jnp.dot(x1, w_ref[ry, 1], preferred_element_type=jnp.float32)
        y = y + bias2d                                   # (tH*W, 2*Cout)
        o_ref[0, :, ry, :, :] = y.reshape(tH, W, Co2).astype(o_ref.dtype)


# --------------------------------------------------------------------------- #
# Wrapper helpers
# --------------------------------------------------------------------------- #
def _round_up(v, m):
    return ((v + m - 1) // m) * m


def _vmem_budget_and_limit():
    cap = 64 * 1024 * 1024                      # conservative fallback (v7x)
    try:
        info = pltpu.get_tpu_info()
        cap = int(getattr(info, "vmem_capacity_bytes", cap)) or cap
    except Exception:
        pass
    limit = (cap * 3) // 4                      # ~48 MiB v7x, ~96 MiB v5e/v6e
    budget = (limit * 7) // 8                   # headroom for compiler scratch
    return budget, limit


def _pick_tile_h(H, W, C, Cout, in_item, budget):
    """Largest row tile (multiple of 8 dividing H, or H itself) that fits the
    VMEM budget, accounting for (8,128) layout padding and double buffering."""
    rW = _round_up(W, 8)
    rC = _round_up(C, 128)
    r3C = _round_up(3 * C, 128)
    r2Co = _round_up(2 * Cout, 128)
    fixed = (2 * (2 * 2 * _round_up(3 * C, 8) * r2Co) * in_item    # fused weights
             + 2 * (8 * r2Co) * 4                                  # bias (f32)
             + 2 * 2 * (rW * rC) * in_item)                        # two halo rows
    cands = [t for t in range(H, 0, -1) if H % t == 0 and (t % 8 == 0 or t == H)]
    for t in cands:
        x_b = 2 * t * rW * rC * in_item                            # main tile x2
        o_b = 2 * t * 2 * rW * r2Co * 4                            # f32 out x2
        s_b = (t + 2) * rW * r3C * in_item                         # staging scratch
        if fixed + x_b + o_b + s_b <= budget:
            return t
    return cands[-1]


def _fuse_weights(weight, dtype):
    """(Cin, Cout, 4, 4) -> (2, 2, 3*Cin, 2*Cout) rx+column-tap fused weights."""
    C, Cout = weight.shape[0], weight.shape[1]
    kmap = ((3, 1), (2, 0))     # output parity r -> original kernel taps (dy/dx)
    z = jnp.zeros((C, Cout), weight.dtype)
    per_ry = []
    for ry in range(2):
        per_dy = []
        for dy in range(2):
            ky = kmap[ry][dy]
            off0 = jnp.concatenate([weight[:, :, ky, kmap[0][0]], z], axis=1)
            off1 = jnp.concatenate([weight[:, :, ky, kmap[0][1]],
                                    weight[:, :, ky, kmap[1][0]]], axis=1)
            off2 = jnp.concatenate([z, weight[:, :, ky, kmap[1][1]]], axis=1)
            per_dy.append(jnp.concatenate([off0, off1, off2], axis=0))  # (3C,2Cout)
        per_ry.append(jnp.stack(per_dy, axis=0))
    return jnp.stack(per_ry, axis=0).astype(dtype)      # (2, 2, 3C, 2Cout)


# --------------------------------------------------------------------------- #
# Public entry points
# --------------------------------------------------------------------------- #
def upsample_pallas_nhwc(x, weight, bias, *, tile_h=None, compute_dtype=None):
    """ConvTranspose2d(C, Cout, (4,4), stride=2, padding=1), channels-last.

    x: (N, H, W, C).  weight: (Cin, Cout, 4, 4) (PyTorch layout).  bias: (Cout,).
    Returns (N, 2H, 2W, Cout) float32.  compute_dtype=bfloat16 is fine on all
    TPU generations (f32 MXU accumulation); float32 is exact.
    """
    N, H, W, C = x.shape
    Cin, Cout, KH, KW = weight.shape
    assert (Cin, KH, KW) == (C, 4, 4), "expected ConvTranspose2d(C, Cout, 4, 4) weights"
    if compute_dtype is None:
        compute_dtype = x.dtype
    in_item = jnp.dtype(compute_dtype).itemsize

    budget, vmem_limit = _vmem_budget_and_limit()
    if tile_h is None:
        tile_h = _pick_tile_h(H, W, C, Cout, in_item, budget)
    if H % tile_h != 0 or not (tile_h % 8 == 0 or tile_h == H):
        raise ValueError(f"tile_h={tile_h} must divide H={H} and be a multiple "
                         f"of 8 (or equal H)")
    n_tiles = H // tile_h

    x = x.astype(compute_dtype)
    # TODO(synk): for very large C*Cout, single-buffer the grid-invariant fused
    # weight (pl.Buffered(1)) or add a Cin reduction grid axis with a VMEM
    # accumulator so the weight tile stays within v7x's 64 MiB.
    wfused = _fuse_weights(weight, compute_dtype)                     # (2,2,3C,2Co)
    b2 = jnp.concatenate([bias, bias]).reshape(1, 2 * Cout).astype(jnp.float32)

    flops = 48 * N * H * W * C * Cout                                 # issued MXU flops
    bytes_accessed = int(x.size * in_item + wfused.size * in_item
                         + b2.size * 4 + N * H * W * 4 * Cout * 4)
    cost = pl.CostEstimate(flops=flops, transcendentals=0,
                           bytes_accessed=bytes_accessed)

    y5 = pl.pallas_call(
        _upsample_kernel,
        out_shape=jax.ShapeDtypeStruct((N, H, 2, W, 2 * Cout), jnp.float32),
        grid=(N, n_tiles),
        in_specs=[
            pl.BlockSpec((1, tile_h, W, C), lambda n, i: (n, i, 0, 0)),
            pl.BlockSpec((1, 1, W, C),
                         lambda n, i: (n, jnp.maximum(i * tile_h - 1, 0), 0, 0)),
            pl.BlockSpec((1, 1, W, C),
                         lambda n, i: (n, jnp.minimum((i + 1) * tile_h, H - 1), 0, 0)),
            pl.BlockSpec((2, 2, 3 * C, 2 * Cout), lambda n, i: (0, 0, 0, 0)),
            pl.BlockSpec((1, 2 * Cout), lambda n, i: (0, 0)),
        ],
        out_specs=pl.BlockSpec((1, tile_h, 2, W, 2 * Cout),
                               lambda n, i: (n, i, 0, 0, 0)),
        scratch_shapes=[pltpu.VMEM((tile_h + 2, W, 3 * C), compute_dtype)],
        compiler_params=pltpu.CompilerParams(
            dimension_semantics=("parallel", "parallel"),
            vmem_limit_bytes=vmem_limit),
        cost_estimate=cost,
    )(x, x, x, wfused, b2)

    # Flat layout of (N, H, 2, W, 2*Cout) is exactly NHWC (N, 2H, 2W, Cout):
    # this reshape is free (no transpose over the 4x-sized output).
    return y5.reshape(N, 2 * H, 2 * W, Cout)


def upsample_pallas(x_nchw, weight, bias, *, tile_h=None, compute_dtype=None):
    """NCHW module contract: x (N, C, H, W) -> (N, Cout, 2H, 2W)."""
    # TODO(synk): channels-last callers should use upsample_pallas_nhwc directly
    # and skip these two HBM transpose passes entirely.
    x = jnp.transpose(x_nchw, (0, 2, 3, 1))
    y = upsample_pallas_nhwc(x, weight, bias, tile_h=tile_h,
                             compute_dtype=compute_dtype)
    return jnp.transpose(y, (0, 3, 1, 2))


def upsample_forward(x, t, weight, bias, **kw):
    """Mirror of UpSample.forward(x, t): t is unused."""
    _ = t
    return upsample_pallas(x, weight, bias, **kw)


# --------------------------------------------------------------------------- #
# Pure-JAX reference and self-test
# --------------------------------------------------------------------------- #
def upsample_ref(x, weight, bias):
    """Reference ConvTranspose2d(k=4, s=2, p=1), NCHW, float32."""
    N, C, H, W = x.shape
    Cout = weight.shape[1]
    yfull = jnp.zeros((N, Cout, 2 * H + 2, 2 * W + 2), jnp.float32)
    for ky in range(4):
        for kx in range(4):
            contrib = jnp.einsum('nchw,cd->ndhw', x, weight[:, :, ky, kx],
                                 precision=jax.lax.Precision.HIGHEST)
            yfull = yfull.at[:, :, ky:ky + 2 * H:2, kx:kx + 2 * W:2].add(contrib)
    return yfull[:, :, 1:2 * H + 1, 1:2 * W + 1] + bias[None, :, None, None]


def _check(y, y_ref, tag, rel_tol=1e-2):
    err = float(jnp.max(jnp.abs(y - y_ref)))
    scale = float(jnp.max(jnp.abs(y_ref))) + 1e-6
    assert err <= rel_tol * scale, f"{tag}: max_abs_err={err}, scale={scale}"


if __name__ == "__main__":
    key = jax.random.PRNGKey(0)
    k1, k2, k3, k4, k5, k6 = jax.random.split(key, 6)

    # ---- test 1: module-sized small shapes (NCHW contract), 2 row tiles ----
    N, C, H, W = 2, 4, 16, 16
    x = jax.random.normal(k1, (N, C, H, W), dtype=jnp.float32)
    weight = jax.random.normal(k2, (C, C, 4, 4), dtype=jnp.float32) * 0.1
    bias = jax.random.normal(k3, (C,), dtype=jnp.float32) * 0.1
    t = jnp.zeros((N,), dtype=jnp.float32)          # unused by forward

    y_ref = upsample_ref(x, weight, bias)

    y = jax.block_until_ready(upsample_forward(x, t, weight, bias, tile_h=8))
    assert y.shape == (N, C, 2 * H, 2 * W), y.shape
    _check(y, y_ref, "small/tiled")

    # same shapes, auto tile pick (single tile; both halos at image boundary)
    y_auto = jax.block_until_ready(upsample_pallas(x, weight, bias))
    _check(y_auto, y_ref, "small/auto")

    # ---- test 2: lane-aligned channels (C=128) + interior row tile ---------
    N2, C2, H2, W2 = 1, 128, 24, 16
    x2 = jax.random.normal(k4, (N2, C2, H2, W2), dtype=jnp.float32)
    w2 = jax.random.normal(k5, (C2, C2, 4, 4), dtype=jnp.float32) * 0.05
    b2 = jax.random.normal(k6, (C2,), dtype=jnp.float32) * 0.1

    y2 = jax.block_until_ready(upsample_pallas(x2, w2, b2, tile_h=8))
    y2_ref = upsample_ref(x2, w2, b2)
    assert y2.shape == (N2, C2, 2 * H2, 2 * W2), y2.shape
    _check(y2, y2_ref, "aligned/interior-tile", rel_tol=2e-2)

    print("KERNEL_OK")
</pallas_src>

<mosaic_0001>
module attributes {stable_mosaic.version = 11 : i64} {
  func.func @_upsample_kernel(%arg0: i32, %arg1: i32, %arg2: memref<1x8x16x4xf32, #tpu.memory_space<vmem>>, %arg3: memref<1x1x16x4xf32, #tpu.memory_space<vmem>>, %arg4: memref<1x1x16x4xf32, #tpu.memory_space<vmem>>, %arg5: memref<2x2x12x8xf32, #tpu.memory_space<vmem>>, %arg6: memref<1x8xf32, #tpu.memory_space<vmem>>, %arg7: memref<1x8x2x16x8xf32, #tpu.memory_space<vmem>>, %arg8: memref<10x16x12xf32, #tpu.memory_space<vmem>>) attributes {dimension_semantics = [#tpu.dimension_semantics<parallel>, #tpu.dimension_semantics<parallel>], iteration_bounds = array<i64: 2, 2>, scalar_prefetch = 0 : i64, scratch_operands = 1 : i64, tpu.core_type = #tpu.core_type<tc>, window_params = [{transform_indices = @transform_0, window_bounds = array<i64: 1, 8, 16, 4>}, {transform_indices = @transform_1, window_bounds = array<i64: 1, 1, 16, 4>}, {transform_indices = @transform_2, window_bounds = array<i64: 1, 1, 16, 4>}, {pipeline_mode = #tpu.pipeline_mode<synchronous>, transform_indices = @transform_3, window_bounds = array<i64: 2, 2, 12, 8>}, {pipeline_mode = #tpu.pipeline_mode<synchronous>, transform_indices = @transform_4, window_bounds = array<i64: 1, 8>}, {transform_indices = @transform_5, window_bounds = array<i64: 1, 8, 2, 16, 8>}]} {
    %c0_i32 = arith.constant 0 : i32
    %0 = arith.cmpi sgt, %arg1, %c0_i32 : i32
    %1 = arith.extui %0 : i1 to i32
    %2 = arith.sitofp %1 : i32 to f32
    %c1_i32 = arith.constant 1 : i32
    %3 = arith.cmpi slt, %arg1, %c1_i32 : i32
    %4 = arith.extui %3 : i1 to i32
    %5 = arith.sitofp %4 : i32 to f32
    %c0 = arith.constant 0 : index
    %c0_0 = arith.constant 0 : index
    %c0_1 = arith.constant 0 : index
    %c0_2 = arith.constant 0 : index
    %6 = vector.load %arg2[%c0, %c0_0, %c0_1, %c0_2] : memref<1x8x16x4xf32, #tpu.memory_space<vmem>>, vector<1x8x16x4xf32>
    %7 = vector.shape_cast %6 : vector<1x8x16x4xf32> to vector<8x16x4xf32>
    %cst = arith.constant 0.000000e+00 : f32
    %8 = vector.broadcast %cst : f32 to vector<8x1x4xf32>
    %9 = vector.extract_strided_slice %7 {offsets = [0, 0, 0], sizes = [8, 15, 4], strides = [1, 1, 1]} : vector<8x16x4xf32> to vector<8x15x4xf32>
    %10 = tpu.concatenate %8, %9 in 1 : vector<8x1x4xf32>, vector<8x15x4xf32> -> vector<8x16x4xf32>
    %11 = vector.extract_strided_slice %7 {offsets = [0, 1, 0], sizes = [8, 15, 4], strides = [1, 1, 1]} : vector<8x16x4xf32> to vector<8x15x4xf32>
    %12 = tpu.concatenate %11, %8 in 1 : vector<8x15x4xf32>, vector<8x1x4xf32> -> vector<8x16x4xf32>
    %13 = tpu.concatenate %10, %7, %12 in 2 : vector<8x16x4xf32>, vector<8x16x4xf32>, vector<8x16x4xf32> -> vector<8x16x12xf32>
    %c1 = arith.constant 1 : index
    %c0_3 = arith.constant 0 : index
    %c0_4 = arith.constant 0 : index
    %14 = vector.load %arg8[%c1, %c0_3, %c0_4] : memref<10x16x12xf32, #tpu.memory_space<vmem>>, vector<8x16x12xf32>
    tpu.vector_store %arg8[%c1, %c0_3, %c0_4], %13 {strides = array<i32>} : memref<10x16x12xf32, #tpu.memory_space<vmem>>, vector<8x16x12xf32>,
    %c0_5 = arith.constant 0 : index
    %c0_6 = arith.constant 0 : index
    %c0_7 = arith.constant 0 : index
    %c0_8 = arith.constant 0 : index
    %15 = vector.load %arg3[%c0_5, %c0_6, %c0_7, %c0_8] : memref<1x1x16x4xf32, #tpu.memory_space<vmem>>, vector<1x1x16x4xf32>
    %16 = vector.shape_cast %15 : vector<1x1x16x4xf32> to vector<1x16x4xf32>
    %17 = vector.broadcast %2 : f32 to vector<1x16x4xf32>
    %18 = arith.mulf %16, %17 : vector<1x16x4xf32>
    %cst_9 = arith.constant 0.000000e+00 : f32
    %19 = vector.broadcast %cst_9 : f32 to vector<1x1x4xf32>
    %20 = vector.extract_strided_slice %18 {offsets = [0, 0, 0], sizes = [1, 15, 4], strides = [1, 1, 1]} : vector<1x16x4xf32> to vector<1x15x4xf32>
    %21 = tpu.concatenate %19, %20 in 1 : vector<1x1x4xf32>, vector<1x15x4xf32> -> vector<1x16x4xf32>
    %22 = vector.extract_strided_slice %18 {offsets = [0, 1, 0], sizes = [1, 15, 4], strides = [1, 1, 1]} : vector<1x16x4xf32> to vector<1x15x4xf32>
    %23 = tpu.concatenate %22, %19 in 1 : vector<1x15x4xf32>, vector<1x1x4xf32> -> vector<1x16x4xf32>
    %24 = tpu.concatenate %21, %18, %23 in 2 : vector<1x16x4xf32>, vector<1x16x4xf32>, vector<1x16x4xf32> -> vector<1x16x12xf32>
    %c0_10 = arith.constant 0 : index
    %c0_11 = arith.constant 0 : index
    %c0_12 = arith.constant 0 : index
    %25 = vector.load %arg8[%c0_10, %c0_11, %c0_12] : memref<10x16x12xf32, #tpu.memory_space<vmem>>, vector<1x16x12xf32>
    tpu.vector_store %arg8[%c0_10, %c0_11, %c0_12], %24 {strides = array<i32>} : memref<10x16x12xf32, #tpu.memory_space<vmem>>, vector<1x16x12xf32>,
    %c0_13 = arith.constant 0 : index
    %c0_14 = arith.constant 0 : index
    %c0_15 = arith.constant 0 : index
    %c0_16 = arith.constant 0 : index
    %26 = vector.load %arg4[%c0_13, %c0_14, %c0_15, %c0_16] : memref<1x1x16x4xf32, #tpu.memory_space<vmem>>, vector<1x1x16x4xf32>
    %27 = vector.shape_cast %26 : vector<1x1x16x4xf32> to vector<1x16x4xf32>
    %28 = vector.broadcast %5 : f32 to vector<1x16x4xf32>
    %29 = arith.mulf %27, %28 : vector<1x16x4xf32>
    %cst_17 = arith.constant 0.000000e+00 : f32
    %30 = vector.broadcast %cst_17 : f32 to vector<1x1x4xf32>
    %31 = vector.extract_strided_slice %29 {offsets = [0, 0, 0], sizes = [1, 15, 4], strides = [1, 1, 1]} : vector<1x16x4xf32> to vector<1x15x4xf32>
    %32 = tpu.concatenate %30, %31 in 1 : vector<1x1x4xf32>, vector<1x15x4xf32> -> vector<1x16x4xf32>
    %33 = vector.extract_strided_slice %29 {offsets = [0, 1, 0], sizes = [1, 15, 4], strides = [1, 1, 1]} : vector<1x16x4xf32> to vector<1x15x4xf32>
    %34 = tpu.concatenate %33, %30 in 1 : vector<1x15x4xf32>, vector<1x1x4xf32> -> vector<1x16x4xf32>
    %35 = tpu.concatenate %32, %29, %34 in 2 : vector<1x16x4xf32>, vector<1x16x4xf32>, vector<1x16x4xf32> -> vector<1x16x12xf32>
    %c9 = arith.constant 9 : index
    %c0_18 = arith.constant 0 : index
    %c0_19 = arith.constant 0 : index
    %36 = vector.load %arg8[%c9, %c0_18, %c0_19] : memref<10x16x12xf32, #tpu.memory_space<vmem>>, vector<1x16x12xf32>
    tpu.vector_store %arg8[%c9, %c0_18, %c0_19], %35 {strides = array<i32>} : memref<10x16x12xf32, #tpu.memory_space<vmem>>, vector<1x16x12xf32>,
    %c0_20 = arith.constant 0 : index
    %c0_21 = arith.constant 0 : index
    %37 = vector.load %arg6[%c0_20, %c0_21] : memref<1x8xf32, #tpu.memory_space<vmem>>, vector<1x8xf32>
    %c0_22 = arith.constant 0 : index
    %c0_23 = arith.constant 0 : index
    %c0_24 = arith.constant 0 : index
    %38 = vector.load %arg8[%c0_22, %c0_23, %c0_24] : memref<10x16x12xf32, #tpu.memory_space<vmem>>, vector<8x16x12xf32>
    %39 = vector.shape_cast %38 : vector<8x16x12xf32> to vector<128x12xf32>
    %c1_25 = arith.constant 1 : index
    %c0_26 = arith.constant 0 : index
    %c0_27 = arith.constant 0 : index
    %40 = vector.load %arg8[%c1_25, %c0_26, %c0_27] : memref<10x16x12xf32, #tpu.memory_space<vmem>>, vector<8x16x12xf32>
    %41 = vector.shape_cast %40 : vector<8x16x12xf32> to vector<128x12xf32>
    %c0_28 = arith.constant 0 : index
    %c0_29 = arith.constant 0 : index
    %c0_30 = arith.constant 0 : index
    %c0_31 = arith.constant 0 : index
    %42 = vector.load %arg5[%c0_28, %c0_29, %c0_30, %c0_31] : memref<2x2x12x8xf32, #tpu.memory_space<vmem>>, vector<1x1x12x8xf32>
    %43 = vector.shape_cast %42 : vector<1x1x12x8xf32> to vector<12x8xf32>
    %cst_32 = arith.constant dense<0.000000e+00> : vector<128x8xf32>
    %44 = tpu.matmul %39, %43, %cst_32 {dimension_numbers = #tpu.dot_dimension_numbers<[1], [0], [0], [1], [0, 0, 1, 1], [], []>} : vector<128x12xf32>, vector<12x8xf32>, vector<128x8xf32> -> vector<128x8xf32>
    %c0_33 = arith.constant 0 : index
    %c1_34 = arith.constant 1 : index
    %c0_35 = arith.constant 0 : index
    %c0_36 = arith.constant 0 : index
    %45 = vector.load %arg5[%c0_33, %c1_34, %c0_35, %c0_36] : memref<2x2x12x8xf32, #tpu.memory_space<vmem>>, vector<1x1x12x8xf32>
    %46 = vector.shape_cast %45 : vector<1x1x12x8xf32> to vector<12x8xf32>
    %cst_37 = arith.constant dense<0.000000e+00> : vector<128x8xf32>
    %47 = tpu.matmul %41, %46, %cst_37 {dimension_numbers = #tpu.dot_dimension_numbers<[1], [0], [0], [1], [0, 0, 1, 1], [], []>} : vector<128x12xf32>, vector<12x8xf32>, vector<128x8xf32> -> vector<128x8xf32>
    %48 = arith.addf %44, %47 : vector<128x8xf32>
    %49 = vector.broadcast %37 : vector<1x8xf32> to vector<128x8xf32>
    %50 = arith.addf %48, %49 : vector<128x8xf32>
    %51 = vector.shape_cast %50 : vector<128x8xf32> to vector<8x16x8xf32>
    %c0_38 = arith.constant 0 : index
    %c0_39 = arith.constant 0 : index
    %c0_40 = arith.constant 0 : index
    %c0_41 = arith.constant 0 : index
    %c0_42 = arith.constant 0 : index
    %52 = vector.load %arg7[%c0_38, %c0_39, %c0_40, %c0_41, %c0_42] : memref<1x8x2x16x8xf32, #tpu.memory_space<vmem>>, vector<1x8x1x16x8xf32>
    %53 = vector.shape_cast %52 : vector<1x8x1x16x8xf32> to vector<8x16x8xf32>
    %54 = vector.shape_cast %51 : vector<8x16x8xf32> to vector<1x8x1x16x8xf32>
    tpu.vector_store %arg7[%c0_38, %c0_39, %c0_40, %c0_41, %c0_42], %54 {strides = array<i32>} : memref<1x8x2x16x8xf32, #tpu.memory_space<vmem>>, vector<1x8x1x16x8xf32>,
    %c1_43 = arith.constant 1 : index
    %c0_44 = arith.constant 0 : index
    %c0_45 = arith.constant 0 : index
    %55 = vector.load %arg8[%c1_43, %c0_44, %c0_45] : memref<10x16x12xf32, #tpu.memory_space<vmem>>, vector<8x16x12xf32>
    %56 = vector.shape_cast %55 : vector<8x16x12xf32> to vector<128x12xf32>
    %c2 = arith.constant 2 : index
    %c0_46 = arith.constant 0 : index
    %c0_47 = arith.constant 0 : index
    %57 = vector.load %arg8[%c2, %c0_46, %c0_47] : memref<10x16x12xf32, #tpu.memory_space<vmem>>, vector<8x16x12xf32>
    %58 = vector.shape_cast %57 : vector<8x16x12xf32> to vector<128x12xf32>
    %c1_48 = arith.constant 1 : index
    %c0_49 = arith.constant 0 : index
    %c0_50 = arith.constant 0 : index
    %c0_51 = arith.constant 0 : index
    %59 = vector.load %arg5[%c1_48, %c0_49, %c0_50, %c0_51] : memref<2x2x12x8xf32, #tpu.memory_space<vmem>>, vector<1x1x12x8xf32>
    %60 = vector.shape_cast %59 : vector<1x1x12x8xf32> to vector<12x8xf32>
    %cst_52 = arith.constant dense<0.000000e+00> : vector<128x8xf32>
    %61 = tpu.matmul %56, %60, %cst_52 {dimension_numbers = #tpu.dot_dimension_numbers<[1], [0], [0], [1], [0, 0, 1, 1], [], []>} : vector<128x12xf32>, vector<12x8xf32>, vector<128x8xf32> -> vector<128x8xf32>
    %c1_53 = arith.constant 1 : index
    %c1_54 = arith.constant 1 : index
    %c0_55 = arith.constant 0 : index
    %c0_56 = arith.constant 0 : index
    %62 = vector.load %arg5[%c1_53, %c1_54, %c0_55, %c0_56] : memref<2x2x12x8xf32, #tpu.memory_space<vmem>>, vector<1x1x12x8xf32>
    %63 = vector.shape_cast %62 : vector<1x1x12x8xf32> to vector<12x8xf32>
    %cst_57 = arith.constant dense<0.000000e+00> : vector<128x8xf32>
    %64 = tpu.matmul %58, %63, %cst_57 {dimension_numbers = #tpu.dot_dimension_numbers<[1], [0], [0], [1], [0, 0, 1, 1], [], []>} : vector<128x12xf32>, vector<12x8xf32>, vector<128x8xf32> -> vector<128x8xf32>
    %65 = arith.addf %61, %64 : vector<128x8xf32>
    %66 = vector.broadcast %37 : vector<1x8xf32> to vector<128x8xf32>
    %67 = arith.addf %65, %66 : vector<128x8xf32>
    %68 = vector.shape_cast %67 : vector<128x8xf32> to vector<8x16x8xf32>
    %c0_58 = arith.constant 0 : index
    %c0_59 = arith.constant 0 : index
    %c1_60 = arith.constant 1 : index
    %c0_61 = arith.constant 0 : index
    %c0_62 = arith.constant 0 : index
    %69 = vector.load %arg7[%c0_58, %c0_59, %c1_60, %c0_61, %c0_62] : memref<1x8x2x16x8xf32, #tpu.memory_space<vmem>>, vector<1x8x1x16x8xf32>
    %70 = vector.shape_cast %69 : vector<1x8x1x16x8xf32> to vector<8x16x8xf32>
    %71 = vector.shape_cast %68 : vector<8x16x8xf32> to vector<1x8x1x16x8xf32>
    tpu.vector_store %arg7[%c0_58, %c0_59, %c1_60, %c0_61, %c0_62], %71 {strides = array<i32>} : memref<1x8x2x16x8xf32, #tpu.memory_space<vmem>>, vector<1x8x1x16x8xf32>,
    return
  }
  func.func @transform_0(%arg0: i32, %arg1: i32) -> (i32, i32, i32, i32) {
    %c0_i32 = arith.constant 0 : i32
    %c0_i32_0 = arith.constant 0 : i32
    %c0_i32_1 = arith.constant 0 : i32
    return %arg0, %arg1, %c0_i32, %c0_i32_0 : i32, i32, i32, i32
  }
  func.func @transform_1(%arg0: i32, %arg1: i32) -> (i32, i32, i32, i32) {
    %c8_i32 = arith.constant 8 : i32
    %0 = arith.muli %arg1, %c8_i32 : i32
    %c1_i32 = arith.constant 1 : i32
    %1 = arith.subi %0, %c1_i32 : i32
    %c0_i32 = arith.constant 0 : i32
    %2 = arith.maxsi %1, %c0_i32 : i32
    %c0_i32_0 = arith.constant 0 : i32
    %c0_i32_1 = arith.constant 0 : i32
    %c0_i32_2 = arith.constant 0 : i32
    return %arg0, %2, %c0_i32_0, %c0_i32_1 : i32, i32, i32, i32
  }
  func.func @transform_2(%arg0: i32, %arg1: i32) -> (i32, i32, i32, i32) {
    %c1_i32 = arith.constant 1 : i32
    %0 = arith.addi %arg1, %c1_i32 : i32
    %c8_i32 = arith.constant 8 : i32
    %1 = arith.muli %0, %c8_i32 : i32
    %c15_i32 = arith.constant 15 : i32
    %2 = arith.minsi %1, %c15_i32 : i32
    %c0_i32 = arith.constant 0 : i32
    %c0_i32_0 = arith.constant 0 : i32
    %c0_i32_1 = arith.constant 0 : i32
    return %arg0, %2, %c0_i32, %c0_i32_0 : i32, i32, i32, i32
  }
  func.func @transform_3(%arg0: i32, %arg1: i32) -> (i32, i32, i32, i32) {
    %c0_i32 = arith.constant 0 : i32
    %c0_i32_0 = arith.constant 0 : i32
    %c0_i32_1 = arith.constant 0 : i32
    %c0_i32_2 = arith.constant 0 : i32
    %c0_i32_3 = arith.constant 0 : i32
    return %c0_i32, %c0_i32_0, %c0_i32_1, %c0_i32_2 : i32, i32, i32, i32
  }
  func.func @transform_4(%arg0: i32, %arg1: i32) -> (i32, i32) {
    %c0_i32 = arith.constant 0 : i32
    %c0_i32_0 = arith.constant 0 : i32
    %c0_i32_1 = arith.constant 0 : i32
    return %c0_i32, %c0_i32_0 : i32, i32
  }
  func.func @transform_5(%arg0: i32, %arg1: i32) -> (i32, i32, i32, i32, i32) {
    %c0_i32 = arith.constant 0 : i32
    %c0_i32_0 = arith.constant 0 : i32
    %c0_i32_1 = arith.constant 0 : i32
    %c0_i32_2 = arith.constant 0 : i32
    return %arg0, %arg1, %c0_i32, %c0_i32_0, %c0_i32_1 : i32, i32, i32, i32, i32
  }
}

</mosaic_0001>

<llo_original>
// kernel: tpu_custom_call.1
$region0: #{tpu_custom_call.1}
  #allocation0 [shape = 'u32[]', space=smem, size = 0x4, offset = 0x4, fixed_abs, tag = 'smem constant byte address 0x4 - core index']
  #allocation1 [shape = 'u32[144,128]{1,0:T(1,128)}', space=vmem, size = 0x12000, scoped, tag = 'internal scratch']
  #allocation2 [shape = 'f32[10,16,12]{2,1,0:T(8,128)}', space=vmem, size = 0x14000, scoped, tag = 'scratch operand']
  %s0 = inlined_call_operand.vmem [shape: f32[2,16,16,4], index: 0, kind: input, shape index: {}]
  %s1 = inlined_call_operand.vmem [shape: f32[2,16,16,4], index: 1, kind: input, shape index: {}]
  %s2 = inlined_call_operand.vmem [shape: f32[2,16,16,4], index: 2, kind: input, shape index: {}]
  %s3 = inlined_call_operand.vmem [shape: f32[2,2,12,8], index: 3, kind: input, shape index: {}]
  %s4 = inlined_call_operand.vmem [shape: f32[1,8], index: 4, kind: input, shape index: {}]
  %s5 = inlined_call_operand.vmem [shape: f32[2,16,2,16,8], index: 5, kind: output, shape index: {}]
  %s6 = sld [smem:[#allocation0]]
  $region53: #{tpu_custom_call.1} parent=0
    _
  %s8 = ssub.s32 1, %s6
  %s9 = scalar_select 0, %s8, %s6
  loop: start=0, step=1, limit=6
  $region2: #{tpu_custom_call.1} parent=0 // loop_pre_header
    _
  $region3: #{tpu_custom_call.1} parent=0 // loop_header
    %s11 = sphi 0, %s15
    %p12 = scmp.ge.s32.totalorder %s11, 6
    %s18 = sphi 0, %s30
    %s19 = sphi 0, %s26
    %s20 = sphi 0, %s18
    %s21 = sphi 0, %s19
    %s22 = sphi 0, %s20
    %s23 = sphi 0, %s21
    %s35 = sphi 0, %s37
    %s38 = sphi 0, %s35
    %s39 = sphi 0, %s38
    %s55 = sphi 0, %s39
    %s71 = sphi 0, %s73
    %s74 = sphi 0, %s71
    %s75 = sphi 0, %s74
    %s91 = sphi 0, %s75
    %s107 = sphi 0, %s109
    %s110 = sphi 0, %s107
    %s111 = sphi 0, %s110
    %s127 = sphi 0, %s111
    %s131 = sphi 0, %s131
    %s133 = sphi 0, %s131
    %s134 = sphi 0, %s133
    %s148 = sphi 0, %s134
    %s152 = sphi 0, %s152
    %s154 = sphi 0, %s152
    %s155 = sphi 0, %s154
    %s169 = sphi 0, %s155
    %s177 = sphi 0, %s179
    %s180 = sphi 0, %s177
    %s181 = sphi 0, %s180
    %s197 = sphi 0, %s181
  $region4: #{tpu_custom_call.1} parent=0 // loop_header_branch
    %14 = sbr.rel (%p12) target = $region8
  $region5: #{tpu_custom_call.1} parent=0 // loop_body
    %s16 = ssub.s32 %s11, 1
    %s17 = ssub.s32 %s11, 2
    %s24 = sadd.s32 1, %s19
    %p25 = scmp.ge.s32.totalorder %s24, 2
    %s26 = scalar_select %p25, 0, %s24
    %s27 = sadd.s32 1, %s18
    %s28 = scalar_select %p25, %s27, %s18
    %p29 = scmp.ge.s32.totalorder %s28, 2
    %s30 = scalar_select %p29, 0, %s28
    %s31 = ssub.s32 %s18, %s30
    %s32 = ssub.s32 %s19, %s26
    %s33 = sor.u32 %s31, %s32
    %p34 = scmp.eq.s32.totalorder %s33, 0
    %s36 = sadd.s32 %s35, 1
    %s37 = scalar_select %p34, %s35, %s36
    %p40 = pneg %p34
    %p41 = scmp.eq.s32.totalorder %s11, 3
    %p42 = por %p40, %p41
    %p43 = scmp.ne.s32.totalorder %s35, %s38
    %p44 = scmp.eq.s32.totalorder %s11, 0
    %p45 = por %p43, %p44
    %p46 = scmp.ne.s32.totalorder %s35, %s38
    %p47 = scmp.eq.s32.totalorder %s16, 3
    %p48 = por %p46, %p47
    %p49 = scmp.ne.s32.totalorder %s38, %s39
    %p50 = scmp.eq.s32.totalorder %s16, 0
    %p51 = por %p49, %p50
    %p52 = scmp.ne.s32.totalorder %s38, %s39
    %p53 = scmp.eq.s32.totalorder %s17, 3
    %p54 = por %p52, %p53
    %p56 = scmp.ne.s32.totalorder %s39, %s55
    %p57 = scmp.eq.s32.totalorder %s17, 0
    %p58 = por %p56, %p57
    %s59 = smul.u32 %s19, 8
    %s60 = ssub.s32 %s59, 1
    %p61 = scmp.gt.s32.totalorder %s60, 0
    %s62 = scalar_select %p61, %s60, 0
    %s63 = smul.u32 %s26, 8
    %s64 = ssub.s32 %s63, 1
    %p65 = scmp.gt.s32.totalorder %s64, 0
    %s66 = scalar_select %p65, %s64, 0
    %s67 = ssub.s32 %s18, %s30
    %s68 = ssub.s32 %s62, %s66
    %s69 = sor.u32 %s67, %s68
    %p70 = scmp.eq.s32.totalorder %s69, 0
    %s72 = sadd.s32 %s71, 1
    %s73 = scalar_select %p70, %s71, %s72
    %p76 = pneg %p70
    %p77 = scmp.eq.s32.totalorder %s11, 3
    %p78 = por %p76, %p77
    %p79 = scmp.ne.s32.totalorder %s71, %s74
    %p80 = scmp.eq.s32.totalorder %s11, 0
    %p81 = por %p79, %p80
    %p82 = scmp.ne.s32.totalorder %s71, %s74
    %p83 = scmp.eq.s32.totalorder %s16, 3
    %p84 = por %p82, %p83
    %p85 = scmp.ne.s32.totalorder %s74, %s75
    %p86 = scmp.eq.s32.totalorder %s16, 0
    %p87 = por %p85, %p86
    %p88 = scmp.ne.s32.totalorder %s74, %s75
    %p89 = scmp.eq.s32.totalorder %s17, 3
    %p90 = por %p88, %p89
    %p92 = scmp.ne.s32.totalorder %s75, %s91
    %p93 = scmp.eq.s32.totalorder %s17, 0
    %p94 = por %p92, %p93
    %s95 = sadd.s32 %s19, 1
    %s96 = smul.u32 %s95, 8
    %p97 = scmp.lt.s32.totalorder %s96, 15
    %s98 = scalar_select %p97, %s96, 15
    %s99 = sadd.s32 %s26, 1
    %s100 = smul.u32 %s99, 8
    %p101 = scmp.lt.s32.totalorder %s100, 15
    %s102 = scalar_select %p101, %s100, 15
    %s103 = ssub.s32 %s18, %s30
    %s104 = ssub.s32 %s98, %s102
    %s105 = sor.u32 %s103, %s104
    %p106 = scmp.eq.s32.totalorder %s105, 0
    %s108 = sadd.s32 %s107, 1
    %s109 = scalar_select %p106, %s107, %s108
    %p112 = pneg %p106
    %p113 = scmp.eq.s32.totalorder %s11, 3
    %p114 = por %p112, %p113
    %p115 = scmp.ne.s32.totalorder %s107, %s110
    %p116 = scmp.eq.s32.totalorder %s11, 0
    %p117 = por %p115, %p116
    %p118 = scmp.ne.s32.totalorder %s107, %s110
    %p119 = scmp.eq.s32.totalorder %s16, 3
    %p120 = por %p118, %p119
    %p121 = scmp.ne.s32.totalorder %s110, %s111
    %p122 = scmp.eq.s32.totalorder %s16, 0
    %p123 = por %p121, %p122
    %p124 = scmp.ne.s32.totalorder %s110, %s111
    %p125 = scmp.eq.s32.totalorder %s17, 3
    %p126 = por %p124, %p125
    %p128 = scmp.ne.s32.totalorder %s111, %s127
    %p129 = scmp.eq.s32.totalorder %s17, 0
    %p130 = por %p128, %p129
    %s132 = sadd.s32 %s131, 1
    %p135 = scmp.eq.s32.totalorder %s11, 3
    %p136 = scmp.ne.s32.totalorder %s131, %s133
    %p137 = scmp.eq.s32.totalorder %s11, 0
    %p138 = por %p136, %p137
    %p139 = scmp.ne.s32.totalorder %s131, %s133
    %p140 = scmp.eq.s32.totalorder %s16, 3
    %p141 = por %p139, %p140
    %p142 = scmp.ne.s32.totalorder %s133, %s134
    %p143 = scmp.eq.s32.totalorder %s16, 0
    %p144 = por %p142, %p143
    %p145 = scmp.ne.s32.totalorder %s133, %s134
    %p146 = scmp.eq.s32.totalorder %s17, 3
    %p147 = por %p145, %p146
    %p149 = scmp.ne.s32.totalorder %s134, %s148
    %p150 = scmp.eq.s32.totalorder %s17, 0
    %p151 = por %p149, %p150
    %s153 = sadd.s32 %s152, 1
    %p156 = scmp.eq.s32.totalorder %s11, 3
    %p157 = scmp.ne.s32.totalorder %s152, %s154
    %p158 = scmp.eq.s32.totalorder %s11, 0
    %p159 = por %p157, %p158
    %p160 = scmp.ne.s32.totalorder %s152, %s154
    %p161 = scmp.eq.s32.totalorder %s16, 3
    %p162 = por %p160, %p161
    %p163 = scmp.ne.s32.totalorder %s154, %s155
    %p164 = scmp.eq.s32.totalorder %s16, 0
    %p165 = por %p163, %p164
    %p166 = scmp.ne.s32.totalorder %s154, %s155
    %p167 = scmp.eq.s32.totalorder %s17, 3
    %p168 = por %p166, %p167
    %p170 = scmp.ne.s32.totalorder %s155, %s169
    %p171 = scmp.eq.s32.totalorder %s17, 0
    %p172 = por %p170, %p171
    %s173 = ssub.s32 %s18, %s30
    %s174 = ssub.s32 %s19, %s26
    %s175 = sor.u32 %s173, %s174
    %p176 = scmp.eq.s32.totalorder %s175, 0
    %s178 = sadd.s32 %s177, 1
    %s179 = scalar_select %p176, %s177, %s178
    %p182 = pneg %p176
    %p183 = scmp.eq.s32.totalorder %s11, 3
    %p184 = por %p182, %p183
    %p185 = scmp.ne.s32.totalorder %s177, %s180
    %p186 = scmp.eq.s32.totalorder %s11, 0
    %p187 = por %p185, %p186
    %p188 = scmp.ne.s32.totalorder %s177, %s180
    %p189 = scmp.eq.s32.totalorder %s16, 3
    %p190 = por %p188, %p189
    %p191 = scmp.ne.s32.totalorder %s180, %s181
    %p192 = scmp.eq.s32.totalorder %s16, 0
    %p193 = por %p191, %p192
    %p194 = scmp.ne.s32.totalorder %s180, %s181
    %p195 = scmp.eq.s32.totalorder %s17, 3
    %p196 = por %p194, %p195
    %p198 = scmp.ne.s32.totalorder %s181, %s197
    %p199 = scmp.eq.s32.totalorder %s17, 0
    %p200 = por %p198, %p199
    %p201 = scmp.le.s32.totalorder 1, %s11
    %p202 = scmp.lt.s32.totalorder %s11, 5
    %p203 = pnand %p201, %p202
    %p204 = pneg %p203
    // Predicated region
    $region9: #{tpu_custom_call.1} parent=5 // pred_check
      _
    $region10: #{tpu_custom_call.1} parent=5 // pred_check_branch
      %206 = sbr.rel (%p203) target = $region12
    $region11: #{tpu_custom_call.1} parent=5 // pred_region
      %s207 = ssub.s32 %s11, 1
      // Predicated region
      $region13: #{tpu_custom_call.1} parent=11 // pred_check
        %p208 = pneg %p144
      $region14: #{tpu_custom_call.1} parent=11 // pred_check_branch
        %210 = sbr.rel (%p208) target = $region16
      $region15: #{tpu_custom_call.1} parent=11 // pred_region
        _
      $region16: #{tpu_custom_call.1} parent=11 // pred_fallthru
        _
      // Predicated region
      $region17: #{tpu_custom_call.1} parent=11 // pred_check
        %p211 = pneg %p165
      $region18: #{tpu_custom_call.1} parent=11 // pred_check_branch
        %213 = sbr.rel (%p211) target = $region20
      $region19: #{tpu_custom_call.1} parent=11 // pred_region
        _
      $region20: #{tpu_custom_call.1} parent=11 // pred_fallthru
        _
    $region12: #{tpu_custom_call.1} parent=5 // pred_fallthru
      _
    %p214 = scmp.lt.s32.totalorder %s11, 4
    // Predicated region
    $region21: #{tpu_custom_call.1} parent=5 // pred_check
      %p215 = pneg %p214
    $region22: #{tpu_custom_call.1} parent=5 // pred_check_branch
      %217 = sbr.rel (%p215) target = $region24
    $region23: #{tpu_custom_call.1} parent=5 // pred_region
      // Predicated region
      $region25: #{tpu_custom_call.1} parent=23 // pred_check
        %p218 = pneg %p45
      $region26: #{tpu_custom_call.1} parent=23 // pred_check_branch
        %220 = sbr.rel (%p218) target = $region28
      $region27: #{tpu_custom_call.1} parent=23 // pred_region
        %s221 = smul.u32 8, %s19
        %p222 = scmp.lt.s32.totalorder %s18, 1
        %s223 = scalar_select %p222, %s18, 1
        %p224 = scmp.lt.s32.totalorder %s221, 15
        %s225 = scalar_select %p224, %s221, 15
        %s226 = smul.addr %s225, 2
        %s227 = smul.addr %s223, 32
        %s228 = sadd.s32 %s226, %s227
        %s229 = smul.addr %s228, 8
        %s230 = scalar_lea.vmem %s0, %s229
        %s231 = smul.u32 8, %s19
      $region28: #{tpu_custom_call.1} parent=23 // pred_fallthru
        _
      // Predicated region
      $region29: #{tpu_custom_call.1} parent=23 // pred_check
        %p232 = pneg %p81
      $region30: #{tpu_custom_call.1} parent=23 // pred_check_branch
        %234 = sbr.rel (%p232) target = $region32
      $region31: #{tpu_custom_call.1} parent=23 // pred_region
        %s235 = smul.u32 %s19, 8
        %s236 = ssub.s32 %s235, 1
        %p237 = scmp.gt.s32.totalorder %s236, 0
        %s238 = scalar_select %p237, %s236, 0
        %p239 = scmp.lt.s32.totalorder %s18, 1
        %s240 = scalar_select %p239, %s18, 1
        %p241 = scmp.lt.s32.totalorder %s238, 15
        %s242 = scalar_select %p241, %s238, 15
        %s243 = smul.addr %s242, 2
        %s244 = smul.addr %s240, 32
        %s245 = sadd.s32 %s243, %s244
        %s246 = smul.addr %s245, 8
        %s247 = scalar_lea.vmem %s1, %s246
        %s248 = smul.u32 %s19, 8
        %s249 = ssub.s32 %s248, 1
        %p250 = scmp.gt.s32.totalorder %s249, 0
        %s251 = scalar_select %p250, %s249, 0
      $region32: #{tpu_custom_call.1} parent=23 // pred_fallthru
        _
      // Predicated region
      $region33: #{tpu_custom_call.1} parent=23 // pred_check
        %p252 = pneg %p117
      $region34: #{tpu_custom_call.1} parent=23 // pred_check_branch
        %254 = sbr.rel (%p252) target = $region36
      $region35: #{tpu_custom_call.1} parent=23 // pred_region
        %s255 = sadd.s32 %s19, 1
        %s256 = smul.u32 %s255, 8
        %p257 = scmp.lt.s32.totalorder %s256, 15
        %s258 = scalar_select %p257, %s256, 15
        %p259 = scmp.lt.s32.totalorder %s18, 1
        %s260 = scalar_select %p259, %s18, 1
        %p261 = scmp.lt.s32.totalorder %s258, 15
        %s262 = scalar_select %p261, %s258, 15
        %s263 = smul.addr %s262, 2
        %s264 = smul.addr %s260, 32
        %s265 = sadd.s32 %s263, %s264
        %s266 = smul.addr %s265, 8
        %s267 = scalar_lea.vmem %s2, %s266
        %s268 = sadd.s32 %s19, 1
        %s269 = smul.u32 %s268, 8
        %p270 = scmp.lt.s32.totalorder %s269, 15
        %s271 = scalar_select %p270, %s269, 15
      $region36: #{tpu_custom_call.1} parent=23 // pred_fallthru
        _
    $region24: #{tpu_custom_call.1} parent=5 // pred_fallthru
      _
    %p272 = scmp.le.s32.totalorder 1, %s11
    %p273 = scmp.lt.s32.totalorder %s11, 5
    %p274 = pnand %p272, %p273
    %p275 = pneg %p274
    // Predicated region
    $region37: #{tpu_custom_call.1} parent=5 // pred_check
      _
    $region38: #{tpu_custom_call.1} parent=5 // pred_check_branch
      %277 = sbr.rel (%p274) target = $region40
    $region39: #{tpu_custom_call.1} parent=5 // pred_region
      %s278 = ssub.s32 %s11, 1
      %s279 = smul.u32 8, %s21
      %p280 = scmp.lt.s32.totalorder %s20, 1
      %s281 = scalar_select %p280, %s20, 1
      %p282 = scmp.lt.s32.totalorder %s279, 15
      %s283 = scalar_select %p282, %s279, 15
      %s284 = smul.addr %s283, 2
      %s285 = smul.addr %s281, 32
      %s286 = sadd.s32 %s284, %s285
      %s287 = smul.addr %s286, 8
      %s288 = scalar_lea.vmem %s0, %s287
      %p289 = pneg %p51
      %p290 = pneg %p48
      %s291 = smul.u32 %s21, 8
      %s292 = ssub.s32 %s291, 1
      %p293 = scmp.gt.s32.totalorder %s292, 0
      %s294 = scalar_select %p293, %s292, 0
      %p295 = scmp.lt.s32.totalorder %s20, 1
      %s296 = scalar_select %p295, %s20, 1
      %p297 = scmp.lt.s32.totalorder %s294, 15
      %s298 = scalar_select %p297, %s294, 15
      %s299 = smul.addr %s298, 2
      %s300 = smul.addr %s296, 32
      %s301 = sadd.s32 %s299, %s300
      %s302 = smul.addr %s301, 8
      %s303 = scalar_lea.vmem %s1, %s302
      %p304 = pneg %p87
      %p305 = pneg %p84
      %s306 = sadd.s32 %s21, 1
      %s307 = smul.u32 %s306, 8
      %p308 = scmp.lt.s32.totalorder %s307, 15
      %s309 = scalar_select %p308, %s307, 15
      %p310 = scmp.lt.s32.totalorder %s20, 1
      %s311 = scalar_select %p310, %s20, 1
      %p312 = scmp.lt.s32.totalorder %s309, 15
      %s313 = scalar_select %p312, %s309, 15
      %s314 = smul.addr %s313, 2
      %s315 = smul.addr %s311, 32
      %s316 = sadd.s32 %s314, %s315
      %s317 = smul.addr %s316, 8
      %s318 = scalar_lea.vmem %s2, %s317
      %p319 = pneg %p123
      %p320 = pneg %p120
      %p321 = pneg %p144
      %p322 = pneg %p141
      %p323 = pneg %p165
      %p324 = pneg %p162
      %p325 = pneg %p193
      %p326 = pneg %p190
      %s327 = smul.u32 8, %s21
      %p328 = scmp.lt.s32.totalorder %s20, 1
      %s329 = scalar_select %p328, %s20, 1
      %p330 = scmp.lt.s32.totalorder %s327, 15
      %s331 = scalar_select %p330, %s327, 15
      %s332 = smul.addr %s331, 4
      %s333 = smul.addr %s329, 64
      %s334 = sadd.s32 %s332, %s333
      %s335 = smul.addr %s334, 8
      %s336 = scalar_lea.vmem %s5, %s335
      %s337 = smul.u32 8, %s21
      %p338 = scmp.lt.s32.totalorder %s20, 1
      %s339 = scalar_select %p338, %s20, 1
      %p340 = scmp.lt.s32.totalorder %s337, 15
      %s341 = scalar_select %p340, %s337, 15
      %s342 = smul.addr %s341, 2
      %s343 = smul.addr %s339, 32
      %s344 = sadd.s32 %s342, %s343
      %s345 = smul.addr %s344, 8
      %s346 = scalar_lea.vmem %s0, %s345
      %s347 = smul.u32 8, %s21
      %s348 = smul.u32 %s21, 8
      %s349 = ssub.s32 %s348, 1
      %p350 = scmp.gt.s32.totalorder %s349, 0
      %s351 = scalar_select %p350, %s349, 0
      %p352 = scmp.lt.s32.totalorder %s20, 1
      %s353 = scalar_select %p352, %s20, 1
      %p354 = scmp.lt.s32.totalorder %s351, 15
      %s355 = scalar_select %p354, %s351, 15
      %s356 = smul.addr %s355, 2
      %s357 = smul.addr %s353, 32
      %s358 = sadd.s32 %s356, %s357
      %s359 = smul.addr %s358, 8
      %s360 = scalar_lea.vmem %s1, %s359
      %s361 = smul.u32 %s21, 8
      %s362 = ssub.s32 %s361, 1
      %p363 = scmp.gt.s32.totalorder %s362, 0
      %s364 = scalar_select %p363, %s362, 0
      %s365 = sadd.s32 %s21, 1
      %s366 = smul.u32 %s365, 8
      %p367 = scmp.lt.s32.totalorder %s366, 15
      %s368 = scalar_select %p367, %s366, 15
      %p369 = scmp.lt.s32.totalorder %s20, 1
      %s370 = scalar_select %p369, %s20, 1
      %p371 = scmp.lt.s32.totalorder %s368, 15
      %s372 = scalar_select %p371, %s368, 15
      %s373 = smul.addr %s372, 2
      %s374 = smul.addr %s370, 32
      %s375 = sadd.s32 %s373, %s374
      %s376 = smul.addr %s375, 8
      %s377 = scalar_lea.vmem %s2, %s376
      %s378 = sadd.s32 %s21, 1
      %s379 = smul.u32 %s378, 8
      %p380 = scmp.lt.s32.totalorder %s379, 15
      %s381 = scalar_select %p380, %s379, 15
      %s382 = smul.u32 8, %s21
      %p383 = scmp.lt.s32.totalorder %s20, 1
      %s384 = scalar_select %p383, %s20, 1
      %p385 = scmp.lt.s32.totalorder %s382, 15
      %s386 = scalar_select %p385, %s382, 15
      %s387 = smul.addr %s386, 4
      %s388 = smul.addr %s384, 64
      %s389 = sadd.s32 %s387, %s388
      %s390 = smul.addr %s389, 8
      %s391 = scalar_lea.vmem %s5, %s390
      %s392 = smul.u32 8, %s21
      %p393 = scmp.gt.s32.totalorder %s21, 0
      %s394 = scalar_select %p393, 1, 0
      %s395 = scvt.s32.f32 %s394
      %p396 = scmp.lt.s32.totalorder %s21, 1
      %s397 = scalar_select %p396, 1, 0
      %s398 = scvt.s32.f32 %s397
      %v399 = vld [vmem:[%s346] sm:$0xff]
      %v400 = vld [vmem:[%s346 + $0x8] sm:$0xff]
      %v401 = vld [vmem:[%s346 + $0x10] sm:$0xff]
      %v402 = vld [vmem:[%s346 + $0x18] sm:$0xff]
      %v403 = vld [vmem:[%s346 + $0x20] sm:$0xff]
      %v404 = vld [vmem:[%s346 + $0x28] sm:$0xff]
      %v405 = vld [vmem:[%s346 + $0x30] sm:$0xff]
      %v406 = vld [vmem:[%s346 + $0x38] sm:$0xff]
      %v407 = vld [vmem:[%s346 + $0x40] sm:$0xff]
      %v408 = vld [vmem:[%s346 + $0x48] sm:$0xff]
      %v409 = vld [vmem:[%s346 + $0x50] sm:$0xff]
      %v410 = vld [vmem:[%s346 + $0x58] sm:$0xff]
      %v411 = vld [vmem:[%s346 + $0x60] sm:$0xff]
      %v412 = vld [vmem:[%s346 + $0x68] sm:$0xff]
      %v413 = vld [vmem:[%s346 + $0x70] sm:$0xff]
      %v414 = vld [vmem:[%s346 + $0x78] sm:$0xff]
      %vm431 = vcmask 1040384
      %v432 = vrot.slane %v399, 7
      %v433 = vrot.slane %v400, 7
      %v434 = vsel %vm431, %v432, %v433
      %v435 = vrot.slane %v401, 7
      %v436 = vrot.slane %v402, 7
      %v437 = vsel %vm431, %v435, %v436
      %v438 = vrot.slane %v403, 7
      %v439 = vrot.slane %v404, 7
      %v440 = vsel %vm431, %v438, %v439
      %v441 = vrot.slane %v405, 7
      %v442 = vrot.slane %v406, 7
      %v443 = vsel %vm431, %v441, %v442
      %v444 = vrot.slane %v407, 7
      %v445 = vrot.slane %v408, 7
      %v446 = vsel %vm431, %v444, %v445
      %v447 = vrot.slane %v409, 7
      %v448 = vrot.slane %v410, 7
      %v449 = vsel %vm431, %v447, %v448
      %v450 = vrot.slane %v411, 7
      %v451 = vrot.slane %v412, 7
      %v452 = vsel %vm431, %v450, %v451
      %v453 = vrot.slane %v413, 7
      %v454 = vrot.slane %v414, 7
      %v455 = vsel %vm431, %v453, %v454
      %v472 = vsel %vm431, 0.0, %v432
      %v473 = vsel %vm431, 0.0, %v435
      %v474 = vsel %vm431, 0.0, %v438
      %v475 = vsel %vm431, 0.0, %v441
      %v476 = vsel %vm431, 0.0, %v444
      %v477 = vsel %vm431, 0.0, %v447
      %v478 = vsel %vm431, 0.0, %v450
      %v479 = vsel %vm431, 0.0, %v453
      %vm480 = vcmask 1046528
      %v481 = vrot.slane %v399, 1
      %v482 = vrot.slane %v400, 1
      %v483 = vsel %vm480, %v481, %v482
      %v484 = vrot.slane %v401, 1
      %v485 = vrot.slane %v402, 1
      %v486 = vsel %vm480, %v484, %v485
      %v487 = vrot.slane %v403, 1
      %v488 = vrot.slane %v404, 1
      %v489 = vsel %vm480, %v487, %v488
      %v490 = vrot.slane %v405, 1
      %v491 = vrot.slane %v406, 1
      %v492 = vsel %vm480, %v490, %v491
      %v493 = vrot.slane %v407, 1
      %v494 = vrot.slane %v408, 1
      %v495 = vsel %vm480, %v493, %v494
      %v496 = vrot.slane %v409, 1
      %v497 = vrot.slane %v410, 1
      %v498 = vsel %vm480, %v496, %v497
      %v499 = vrot.slane %v411, 1
      %v500 = vrot.slane %v412, 1
      %v501 = vsel %vm480, %v499, %v500
      %v502 = vrot.slane %v413, 1
      %v503 = vrot.slane %v414, 1
      %v504 = vsel %vm480, %v502, %v503
      %v513 = vsel %vm480, %v482, 0.0
      %v514 = vsel %vm480, %v485, 0.0
      %v515 = vsel %vm480, %v488, 0.0
      %v516 = vsel %vm480, %v491, 0.0
      %v517 = vsel %vm480, %v494, 0.0
      %v518 = vsel %vm480, %v497, 0.0
      %v519 = vsel %vm480, %v500, 0.0
      %v520 = vsel %vm480, %v503, 0.0
      %521 = vrot.lane.b32.xlu0 %v399, 4
      %v522 = vpop.permute.xlu0 %521
      %523 = vrot.lane.b32.xlu0 %v400, 4
      %v524 = vpop.permute.xlu0 %523
      %525 = vrot.lane.b32.xlu0 %v401, 4
      %v526 = vpop.permute.xlu0 %525
      %527 = vrot.lane.b32.xlu0 %v402, 4
      %v528 = vpop.permute.xlu0 %527
      %529 = vrot.lane.b32.xlu0 %v403, 4
      %v530 = vpop.permute.xlu0 %529
      %531 = vrot.lane.b32.xlu0 %v404, 4
      %v532 = vpop.permute.xlu0 %531
      %533 = vrot.lane.b32.xlu0 %v405, 4
      %v534 = vpop.permute.xlu0 %533
      %535 = vrot.lane.b32.xlu0 %v406, 4
      %v536 = vpop.permute.xlu0 %535
      %537 = vrot.lane.b32.xlu0 %v407, 4
      %v538 = vpop.permute.xlu0 %537
      %539 = vrot.lane.b32.xlu0 %v408, 4
      %v540 = vpop.permute.xlu0 %539
      %541 = vrot.lane.b32.xlu0 %v409, 4
      %v542 = vpop.permute.xlu0 %541
      %543 = vrot.lane.b32.xlu0 %v410, 4
      %v544 = vpop.permute.xlu0 %543
      %545 = vrot.lane.b32.xlu0 %v411, 4
      %v546 = vpop.permute.xlu0 %545
      %547 = vrot.lane.b32.xlu0 %v412, 4
      %v548 = vpop.permute.xlu0 %547
      %549 = vrot.lane.b32.xlu0 %v413, 4
      %v550 = vpop.permute.xlu0 %549
      %551 = vrot.lane.b32.xlu0 %v414, 4
      %v552 = vpop.permute.xlu0 %551
      %577 = vrot.lane.b32.xlu0 %v483, 8
      %v578 = vpop.permute.xlu0 %577
      %579 = vrot.lane.b32.xlu0 %v513, 8
      %v580 = vpop.permute.xlu0 %579
      %581 = vrot.lane.b32.xlu0 %v486, 8
      %v582 = vpop.permute.xlu0 %581
      %583 = vrot.lane.b32.xlu0 %v514, 8
      %v584 = vpop.permute.xlu0 %583
      %585 = vrot.lane.b32.xlu0 %v489, 8
      %v586 = vpop.permute.xlu0 %585
      %587 = vrot.lane.b32.xlu0 %v515, 8
      %v588 = vpop.permute.xlu0 %587
      %589 = vrot.lane.b32.xlu0 %v492, 8
      %v590 = vpop.permute.xlu0 %589
      %591 = vrot.lane.b32.xlu0 %v516, 8
      %v592 = vpop.permute.xlu0 %591
      %593 = vrot.lane.b32.xlu0 %v495, 8
      %v594 = vpop.permute.xlu0 %593
      %595 = vrot.lane.b32.xlu0 %v517, 8
      %v596 = vpop.permute.xlu0 %595
      %597 = vrot.lane.b32.xlu0 %v498, 8
      %v598 = vpop.permute.xlu0 %597
      %599 = vrot.lane.b32.xlu0 %v518, 8
      %v600 = vpop.permute.xlu0 %599
      %601 = vrot.lane.b32.xlu0 %v501, 8
      %v602 = vpop.permute.xlu0 %601
      %603 = vrot.lane.b32.xlu0 %v519, 8
      %v604 = vpop.permute.xlu0 %603
      %605 = vrot.lane.b32.xlu0 %v504, 8
      %v606 = vpop.permute.xlu0 %605
      %607 = vrot.lane.b32.xlu0 %v520, 8
      %v608 = vpop.permute.xlu0 %607
      %vm625 = vcmask 31744
      %v626 = vsel %vm625, %v472, %v522
      %v627 = vsel %vm625, %v434, %v524
      %v628 = vsel %vm625, %v473, %v526
      %v629 = vsel %vm625, %v437, %v528
      %v630 = vsel %vm625, %v474, %v530
      %v631 = vsel %vm625, %v440, %v532
      %v632 = vsel %vm625, %v475, %v534
      %v633 = vsel %vm625, %v443, %v536
      %v634 = vsel %vm625, %v476, %v538
      %v635 = vsel %vm625, %v446, %v540
      %v636 = vsel %vm625, %v477, %v542
      %v637 = vsel %vm625, %v449, %v544
      %v638 = vsel %vm625, %v478, %v546
      %v639 = vsel %vm625, %v452, %v548
      %v640 = vsel %vm625, %v479, %v550
      %v641 = vsel %vm625, %v455, %v552
      %vm642 = vcmask 64512
      %v643 = vsel %vm642, %v626, %v578
      %v644 = vsel %vm642, %v627, %v580
      %v645 = vsel %vm642, %v628, %v582
      %v646 = vsel %vm642, %v629, %v584
      %v647 = vsel %vm642, %v630, %v586
      %v648 = vsel %vm642, %v631, %v588
      %v649 = vsel %vm642, %v632, %v590
      %v650 = vsel %vm642, %v633, %v592
      %v651 = vsel %vm642, %v634, %v594
      %v652 = vsel %vm642, %v635, %v596
      %v653 = vsel %vm642, %v636, %v598
      %v654 = vsel %vm642, %v637, %v600
      %v655 = vsel %vm642, %v638, %v602
      %v656 = vsel %vm642, %v639, %v604
      %v657 = vsel %vm642, %v640, %v606
      %v658 = vsel %vm642, %v641, %v608
      %s659 = scalar_lea.vmem [#allocation2], 16
      %vm660 = vcmask 97280
      %661 = vst.msk [vmem:[%s659] sm:$0xff] %vm660, %v643
      %662 = vst.msk [vmem:[%s659 + $0x8] sm:$0xff] %vm660, %v644
      %663 = vst.msk [vmem:[%s659 + $0x10] sm:$0xff] %vm660, %v645
      %664 = vst.msk [vmem:[%s659 + $0x18] sm:$0xff] %vm660, %v646
      %665 = vst.msk [vmem:[%s659 + $0x20] sm:$0xff] %vm660, %v647
      %666 = vst.msk [vmem:[%s659 + $0x28] sm:$0xff] %vm660, %v648
      %667 = vst.msk [vmem:[%s659 + $0x30] sm:$0xff] %vm660, %v649
      %668 = vst.msk [vmem:[%s659 + $0x38] sm:$0xff] %vm660, %v650
      %669 = vst.msk [vmem:[%s659 + $0x40] sm:$0xff] %vm660, %v651
      %670 = vst.msk [vmem:[%s659 + $0x48] sm:$0xff] %vm660, %v652
      %671 = vst.msk [vmem:[%s659 + $0x50] sm:$0xff] %vm660, %v653
      %672 = vst.msk [vmem:[%s659 + $0x58] sm:$0xff] %vm660, %v654
      %673 = vst.msk [vmem:[%s659 + $0x60] sm:$0xff] %vm660, %v655
      %674 = vst.msk [vmem:[%s659 + $0x68] sm:$0xff] %vm660, %v656
      %675 = vst.msk [vmem:[%s659 + $0x70] sm:$0xff] %vm660, %v657
      %676 = vst.msk [vmem:[%s659 + $0x78] sm:$0xff] %vm660, %v658
      %v677 = vld [vmem:[%s360] sm:$0xff]
      %v678 = vld [vmem:[%s360 + $0x8] sm:$0xff]
      %v679 = vstv %s395
      %v680 = vmul.f32 %v677, %v679
      %v681 = vmul.f32 %v678, %v679
      %v684 = vrot.slane %v680, 7
      %v685 = vrot.slane %v681, 7
      %v686 = vsel %vm431, %v684, %v685
      %v689 = vsel %vm431, 0.0, %v684
      %v690 = vrot.slane %v680, 1
      %v691 = vrot.slane %v681, 1
      %v692 = vsel %vm480, %v690, %v691
      %v694 = vsel %vm480, %v691, 0.0
      %695 = vrot.lane.b32.xlu0 %v680, 4
      %v696 = vpop.permute.xlu0 %695
      %697 = vrot.lane.b32.xlu0 %v681, 4
      %v698 = vpop.permute.xlu0 %697
      %702 = vrot.lane.b32.xlu0 %v692, 8
      %v703 = vpop.permute.xlu0 %702
      %704 = vrot.lane.b32.xlu0 %v694, 8
      %v705 = vpop.permute.xlu0 %704
      %v708 = vsel %vm625, %v689, %v696
      %v709 = vsel %vm625, %v686, %v698
      %v710 = vsel %vm642, %v708, %v703
      %v711 = vsel %vm642, %v709, %v705
      %712 = vst.msk [vmem:[#allocation2] sm:$0xff] %vm660, %v710
      %713 = vst.msk [vmem:[#allocation2 + $0x8] sm:$0xff] %vm660, %v711
      %v714 = vld [vmem:[%s377] sm:$0xff]
      %v715 = vld [vmem:[%s377 + $0x8] sm:$0xff]
      %v716 = vstv %s398
      %v717 = vmul.f32 %v714, %v716
      %v718 = vmul.f32 %v715, %v716
      %v721 = vrot.slane %v717, 7
      %v722 = vrot.slane %v718, 7
      %v723 = vsel %vm431, %v721, %v722
      %v726 = vsel %vm431, 0.0, %v721
      %v727 = vrot.slane %v717, 1
      %v728 = vrot.slane %v718, 1
      %v729 = vsel %vm480, %v727, %v728
      %v731 = vsel %vm480, %v728, 0.0
      %732 = vrot.lane.b32.xlu0 %v717, 4
      %v733 = vpop.permute.xlu0 %732
      %734 = vrot.lane.b32.xlu0 %v718, 4
      %v735 = vpop.permute.xlu0 %734
      %739 = vrot.lane.b32.xlu0 %v729, 8
      %v740 = vpop.permute.xlu0 %739
      %741 = vrot.lane.b32.xlu0 %v731, 8
      %v742 = vpop.permute.xlu0 %741
      %v745 = vsel %vm625, %v726, %v733
      %v746 = vsel %vm625, %v723, %v735
      %v747 = vsel %vm642, %v745, %v740
      %v748 = vsel %vm642, %v746, %v742
      %s749 = scalar_lea.vmem [#allocation2], 144
      %750 = vst.msk [vmem:[%s749] sm:$0xff] %vm660, %v747
      %751 = vst.msk [vmem:[%s749 + $0x8] sm:$0xff] %vm660, %v748
      %v752 = vld [vmem:[%s4] sm:$0x1]
      %v753 = vld [vmem:[#allocation2] sm:$0xff]
      %v754 = vld [vmem:[#allocation2 + $0x8] sm:$0xff]
      %v755 = vld [vmem:[#allocation2 + $0x10] sm:$0xff]
      %v756 = vld [vmem:[#allocation2 + $0x18] sm:$0xff]
      %v757 = vld [vmem:[#allocation2 + $0x20] sm:$0xff]
      %v758 = vld [vmem:[#allocation2 + $0x28] sm:$0xff]
      %v759 = vld [vmem:[#allocation2 + $0x30] sm:$0xff]
      %v760 = vld [vmem:[#allocation2 + $0x38] sm:$0xff]
      %v761 = vld [vmem:[#allocation2 + $0x40] sm:$0xff]
      %v762 = vld [vmem:[#allocation2 + $0x48] sm:$0xff]
      %v763 = vld [vmem:[#allocation2 + $0x50] sm:$0xff]
      %v764 = vld [vmem:[#allocation2 + $0x58] sm:$0xff]
      %v765 = vld [vmem:[#allocation2 + $0x60] sm:$0xff]
      %v766 = vld [vmem:[#allocation2 + $0x68] sm:$0xff]
      %v767 = vld [vmem:[#allocation2 + $0x70] sm:$0xff]
      %v768 = vld [vmem:[#allocation2 + $0x78] sm:$0xff]
      %v769 = vld [vmem:[%s659] sm:$0xff]
      %v770 = vld [vmem:[%s659 + $0x8] sm:$0xff]
      %v771 = vld [vmem:[%s659 + $0x10] sm:$0xff]
      %v772 = vld [vmem:[%s659 + $0x18] sm:$0xff]
      %v773 = vld [vmem:[%s659 + $0x20] sm:$0xff]
      %v774 = vld [vmem:[%s659 + $0x28] sm:$0xff]
      %v775 = vld [vmem:[%s659 + $0x30] sm:$0xff]
      %v776 = vld [vmem:[%s659 + $0x38] sm:$0xff]
      %v777 = vld [vmem:[%s659 + $0x40] sm:$0xff]
      %v778 = vld [vmem:[%s659 + $0x48] sm:$0xff]
      %v779 = vld [vmem:[%s659 + $0x50] sm:$0xff]
      %v780 = vld [vmem:[%s659 + $0x58] sm:$0xff]
      %v781 = vld [vmem:[%s659 + $0x60] sm:$0xff]
      %v782 = vld [vmem:[%s659 + $0x68] sm:$0xff]
      %v783 = vld [vmem:[%s659 + $0x70] sm:$0xff]
      %v784 = vld [vmem:[%s659 + $0x78] sm:$0xff]
      %v785 = vld [vmem:[%s3] sm:$0xff]
      %v786 = vld [vmem:[%s3 + $0x8] sm:$0xf]
      %s787 = scalar_lea.vmem %s3, 16
      %v788 = vld [vmem:[%s787] sm:$0xff]
      %v789 = vld [vmem:[%s787 + $0x8] sm:$0xf]
      %v791 = vsel %vm660, %v769, 0
      %v794 = vsel %vm660, %v770, 0
      %v797 = vsel %vm660, %v771, 0
      %v800 = vsel %vm660, %v772, 0
      %v803 = vsel %vm660, %v773, 0
      %v806 = vsel %vm660, %v774, 0
      %v809 = vsel %vm660, %v775, 0
      %v812 = vsel %vm660, %v776, 0
      %v815 = vsel %vm660, %v777, 0
      %v818 = vsel %vm660, %v778, 0
      %v821 = vsel %vm660, %v779, 0
      %v824 = vsel %vm660, %v780, 0
      %v827 = vsel %vm660, %v781, 0
      %v830 = vsel %vm660, %v782, 0
      %v833 = vsel %vm660, %v783, 0
      %v836 = vsel %vm660, %v784, 0
      %vm838 = vcmask 1043456
      %v840 = vsel %vm838, %v789, 0
      %842 = vmatprep.subr.mxu0 0.0
      %843 = vmatpush1.msra.mxu0 0.0
      %844 = vmatprep.subr.mxu0 0.0
      %845 = vmatpush1.msra.mxu0 0.0
      %846 = vmatprep.subr.mxu0 0.0
      %847 = vmatpush1.msra.mxu0 0.0
      %848 = vmatprep.subr.mxu0 0.0
      %849 = vmatpush1.msra.mxu0 0.0
      %850 = vmatprep.subr.mxu0 0.0
      %851 = vmatpush1.msra.mxu0 0.0
      %852 = vmatprep.subr.mxu0 0.0
      %853 = vmatpush1.msra.mxu0 0.0
      %854 = vmatprep.subr.mxu0 0.0
      %855 = vmatpush1.msra.mxu0 0.0
      %856 = vmatprep.subr.mxu0 0.0
      %857 = vmatpush1.msra.mxu0 0.0
      %858 = vmatprep.subr.mxu0 0.0
      %859 = vmatpush1.msra.mxu0 0.0
      %860 = vmatprep.subr.mxu0 0.0
      %861 = vmatpush1.msra.mxu0 0.0
      %862 = vmatprep.subr.mxu0 0.0
      %863 = vmatpush1.msra.mxu0 0.0
      %864 = vmatprep.subr.mxu0 0.0
      %865 = vmatpush1.msra.mxu0 0.0
      %866 = vmatprep.subr.mxu0 0.0
      %867 = vmatpush1.msra.mxu0 0.0
      %868 = vmatprep.subr.mxu0 0.0
      %869 = vmatpush1.msra.mxu0 0.0
      %870 = vmatprep.subr.mxu0 0.0
      %871 = vmatpush1.msra.mxu0 %v840
      %872 = vmatprep.subr.mxu0 0.0
      %873 = vmatpush1.msra.mxu0 %v788
      %874 = vmatprep.subr.mxu0 0.0
      %875 = vmatpush2.msra.mxu0 0.0
      %876 = vmatprep.subr.mxu0 0.0
      %877 = vmatpush2.msra.mxu0 0.0
      %878 = vmatprep.subr.mxu0 0.0
      %879 = vmatpush2.msra.mxu0 0.0
      %880 = vmatprep.subr.mxu0 0.0
      %881 = vmatpush2.msra.mxu0 0.0
      %882 = vmatprep.subr.mxu0 0.0
      %883 = vmatpush2.msra.mxu0 0.0
      %884 = vmatprep.subr.mxu0 0.0
      %885 = vmatpush2.msra.mxu0 0.0
      %886 = vmatprep.subr.mxu0 0.0
      %887 = vmatpush2.msra.mxu0 0.0
      %888 = vmatprep.subr.mxu0 0.0
      %889 = vmatpush2.msra.mxu0 0.0
      %890 = vmatprep.subr.mxu0 0.0
      %891 = vmatpush2.msra.mxu0 0.0
      %892 = vmatprep.subr.mxu0 0.0
      %893 = vmatpush2.msra.mxu0 0.0
      %894 = vmatprep.subr.mxu0 0.0
      %895 = vmatpush2.msra.mxu0 0.0
      %896 = vmatprep.subr.mxu0 0.0
      %897 = vmatpush2.msra.mxu0 0.0
      %898 = vmatprep.subr.mxu0 0.0
      %899 = vmatpush2.msra.mxu0 0.0
      %900 = vmatprep.subr.mxu0 0.0
      %901 = vmatpush2.msra.mxu0 0.0
      %902 = vmatprep.subr.mxu0 0.0
      %903 = vmatpush2.msra.mxu0 0.0
      %904 = vmatprep.subr.mxu0 0.0
      %905 = vmatpush2.msra.mxu0 0.0
      %906 = vmatprep.mubr.f32.mxu0 0.0
      %907 = vmatmul.mubr.f32.gmra.mxu0 %v791
      %v908 = vpop.f32.mrf.mxu0
      %v909 = vadd.f32 0.0, %v908
      %v910 = vpop.f32.mrf.mxu0
      %911 = vmatprep.mubr.f32.mxu0 0.0
      %912 = vmatmul.mubr.f32.gmra.mxu0 %v794
      %v913 = vpop.f32.mrf.mxu0
      %v914 = vadd.f32 0.0, %v913
      %v915 = vpop.f32.mrf.mxu0
      %916 = vmatprep.mubr.f32.mxu0 0.0
      %917 = vmatmul.mubr.f32.gmra.mxu0 %v797
      %v918 = vpop.f32.mrf.mxu0
      %v919 = vadd.f32 0.0, %v918
      %v920 = vpop.f32.mrf.mxu0
      %921 = vmatprep.mubr.f32.mxu0 0.0
      %922 = vmatmul.mubr.f32.gmra.mxu0 %v800
      %v923 = vpop.f32.mrf.mxu0
      %v924 = vadd.f32 0.0, %v923
      %v925 = vpop.f32.mrf.mxu0
      %926 = vmatprep.mubr.f32.mxu0 0.0
      %927 = vmatmul.mubr.f32.gmra.mxu0 %v803
      %v928 = vpop.f32.mrf.mxu0
      %v929 = vadd.f32 0.0, %v928
      %v930 = vpop.f32.mrf.mxu0
      %931 = vmatprep.mubr.f32.mxu0 0.0
      %932 = vmatmul.mubr.f32.gmra.mxu0 %v806
      %v933 = vpop.f32.mrf.mxu0
      %v934 = vadd.f32 0.0, %v933
      %v935 = vpop.f32.mrf.mxu0
      %936 = vmatprep.mubr.f32.mxu0 0.0
      %937 = vmatmul.mubr.f32.gmra.mxu0 %v809
      %v938 = vpop.f32.mrf.mxu0
      %v939 = vadd.f32 0.0, %v938
      %v940 = vpop.f32.mrf.mxu0
      %941 = vmatprep.mubr.f32.mxu0 0.0
      %942 = vmatmul.mubr.f32.gmra.mxu0 %v812
      %v943 = vpop.f32.mrf.mxu0
      %v944 = vadd.f32 0.0, %v943
      %v945 = vpop.f32.mrf.mxu0
      %946 = vmatprep.mubr.f32.mxu0 0.0
      %947 = vmatmul.mubr.f32.gmra.mxu0 %v815
      %v948 = vpop.f32.mrf.mxu0
      %v949 = vadd.f32 0.0, %v948
      %v950 = vpop.f32.mrf.mxu0
      %951 = vmatprep.mubr.f32.mxu0 0.0
      %952 = vmatmul.mubr.f32.gmra.mxu0 %v818
      %v953 = vpop.f32.mrf.mxu0
      %v954 = vadd.f32 0.0, %v953
      %v955 = vpop.f32.mrf.mxu0
      %956 = vmatprep.mubr.f32.mxu0 0.0
      %957 = vmatmul.mubr.f32.gmra.mxu0 %v821
      %v958 = vpop.f32.mrf.mxu0
      %v959 = vadd.f32 0.0, %v958
      %v960 = vpop.f32.mrf.mxu0
      %961 = vmatprep.mubr.f32.mxu0 0.0
      %962 = vmatmul.mubr.f32.gmra.mxu0 %v824
      %v963 = vpop.f32.mrf.mxu0
      %v964 = vadd.f32 0.0, %v963
      %v965 = vpop.f32.mrf.mxu0
      %966 = vmatprep.mubr.f32.mxu0 0.0
      %967 = vmatmul.mubr.f32.gmra.mxu0 %v827
      %v968 = vpop.f32.mrf.mxu0
      %v969 = vadd.f32 0.0, %v968
      %v970 = vpop.f32.mrf.mxu0
      %971 = vmatprep.mubr.f32.mxu0 0.0
      %972 = vmatmul.mubr.f32.gmra.mxu0 %v830
      %v973 = vpop.f32.mrf.mxu0
      %v974 = vadd.f32 0.0, %v973
      %v975 = vpop.f32.mrf.mxu0
      %976 = vmatprep.mubr.f32.mxu0 0.0
      %977 = vmatmul.mubr.f32.gmra.mxu0 %v833
      %v978 = vpop.f32.mrf.mxu0
      %v979 = vadd.f32 0.0, %v978
      %v980 = vpop.f32.mrf.mxu0
      %981 = vmatprep.mubr.f32.mxu0 0.0
      %982 = vmatmul.mubr.f32.gmra.mxu0 %v836
      %v983 = vpop.f32.mrf.mxu0
      %v984 = vadd.f32 0.0, %v983
      %v985 = vpop.f32.mrf.mxu0
      %986 = vdwg.mxu0
      %v988 = vsel %vm660, %v753, 0
      %v991 = vsel %vm660, %v754, 0
      %v994 = vsel %vm660, %v755, 0
      %v997 = vsel %vm660, %v756, 0
      %v1000 = vsel %vm660, %v757, 0
      %v1003 = vsel %vm660, %v758, 0
      %v1006 = vsel %vm660, %v759, 0
      %v1009 = vsel %vm660, %v760, 0
      %v1012 = vsel %vm660, %v761, 0
      %v1015 = vsel %vm660, %v762, 0
      %v1018 = vsel %vm660, %v763, 0
      %v1021 = vsel %vm660, %v764, 0
      %v1024 = vsel %vm660, %v765, 0
      %v1027 = vsel %vm660, %v766, 0
      %v1030 = vsel %vm660, %v767, 0
      %v1033 = vsel %vm660, %v768, 0
      %v1036 = vsel %vm838, %v786, 0
      %1038 = vmatprep.subr.mxu0 0.0
      %1039 = vmatpush1.msra.mxu0 0.0
      %1040 = vmatprep.subr.mxu0 0.0
      %1041 = vmatpush1.msra.mxu0 0.0
      %1042 = vmatprep.subr.mxu0 0.0
      %1043 = vmatpush1.msra.mxu0 0.0
      %1044 = vmatprep.subr.mxu0 0.0
      %1045 = vmatpush1.msra.mxu0 0.0
      %1046 = vmatprep.subr.mxu0 0.0
      %1047 = vmatpush1.msra.mxu0 0.0
      %1048 = vmatprep.subr.mxu0 0.0
      %1049 = vmatpush1.msra.mxu0 0.0
      %1050 = vmatprep.subr.mxu0 0.0
      %1051 = vmatpush1.msra.mxu0 0.0
      %1052 = vmatprep.subr.mxu0 0.0
      %1053 = vmatpush1.msra.mxu0 0.0
      %1054 = vmatprep.subr.mxu0 0.0
      %1055 = vmatpush1.msra.mxu0 0.0
      %1056 = vmatprep.subr.mxu0 0.0
      %1057 = vmatpush1.msra.mxu0 0.0
      %1058 = vmatprep.subr.mxu0 0.0
      %1059 = vmatpush1.msra.mxu0 0.0
      %1060 = vmatprep.subr.mxu0 0.0
      %1061 = vmatpush1.msra.mxu0 0.0
      %1062 = vmatprep.subr.mxu0 0.0
      %1063 = vmatpush1.msra.mxu0 0.0
      %1064 = vmatprep.subr.mxu0 0.0
      %1065 = vmatpush1.msra.mxu0 0.0
      %1066 = vmatprep.subr.mxu0 0.0
      %1067 = vmatpush1.msra.mxu0 %v1036
      %1068 = vmatprep.subr.mxu0 0.0
      %1069 = vmatpush1.msra.mxu0 %v785
      %1070 = vmatprep.subr.mxu0 0.0
      %1071 = vmatpush2.msra.mxu0 0.0
      %1072 = vmatprep.subr.mxu0 0.0
      %1073 = vmatpush2.msra.mxu0 0.0
      %1074 = vmatprep.subr.mxu0 0.0
      %1075 = vmatpush2.msra.mxu0 0.0
      %1076 = vmatprep.subr.mxu0 0.0
      %1077 = vmatpush2.msra.mxu0 0.0
      %1078 = vmatprep.subr.mxu0 0.0
      %1079 = vmatpush2.msra.mxu0 0.0
      %1080 = vmatprep.subr.mxu0 0.0
      %1081 = vmatpush2.msra.mxu0 0.0
      %1082 = vmatprep.subr.mxu0 0.0
      %1083 = vmatpush2.msra.mxu0 0.0
      %1084 = vmatprep.subr.mxu0 0.0
      %1085 = vmatpush2.msra.mxu0 0.0
      %1086 = vmatprep.subr.mxu0 0.0
      %1087 = vmatpush2.msra.mxu0 0.0
      %1088 = vmatprep.subr.mxu0 0.0
      %1089 = vmatpush2.msra.mxu0 0.0
      %1090 = vmatprep.subr.mxu0 0.0
      %1091 = vmatpush2.msra.mxu0 0.0
      %1092 = vmatprep.subr.mxu0 0.0
      %1093 = vmatpush2.msra.mxu0 0.0
      %1094 = vmatprep.subr.mxu0 0.0
      %1095 = vmatpush2.msra.mxu0 0.0
      %1096 = vmatprep.subr.mxu0 0.0
      %1097 = vmatpush2.msra.mxu0 0.0
      %1098 = vmatprep.subr.mxu0 0.0
      %1099 = vmatpush2.msra.mxu0 0.0
      %1100 = vmatprep.subr.mxu0 0.0
      %1101 = vmatpush2.msra.mxu0 0.0
      %1102 = vmatprep.mubr.f32.mxu0 0.0
      %1103 = vmatmul.mubr.f32.gmra.mxu0 %v988
      %v1104 = vpop.f32.mrf.mxu0
      %v1105 = vadd.f32 %v909, %v1104
      %v1106 = vpop.f32.mrf.mxu0
      %1107 = vmatprep.mubr.f32.mxu0 0.0
      %1108 = vmatmul.mubr.f32.gmra.mxu0 %v991
      %v1109 = vpop.f32.mrf.mxu0
      %v1110 = vadd.f32 %v914, %v1109
      %v1111 = vpop.f32.mrf.mxu0
      %1112 = vmatprep.mubr.f32.mxu0 0.0
      %1113 = vmatmul.mubr.f32.gmra.mxu0 %v994
      %v1114 = vpop.f32.mrf.mxu0
      %v1115 = vadd.f32 %v919, %v1114
      %v1116 = vpop.f32.mrf.mxu0
      %1117 = vmatprep.mubr.f32.mxu0 0.0
      %1118 = vmatmul.mubr.f32.gmra.mxu0 %v997
      %v1119 = vpop.f32.mrf.mxu0
      %v1120 = vadd.f32 %v924, %v1119
      %v1121 = vpop.f32.mrf.mxu0
      %1122 = vmatprep.mubr.f32.mxu0 0.0
      %1123 = vmatmul.mubr.f32.gmra.mxu0 %v1000
      %v1124 = vpop.f32.mrf.mxu0
      %v1125 = vadd.f32 %v929, %v1124
      %v1126 = vpop.f32.mrf.mxu0
      %1127 = vmatprep.mubr.f32.mxu0 0.0
      %1128 = vmatmul.mubr.f32.gmra.mxu0 %v1003
      %v1129 = vpop.f32.mrf.mxu0
      %v1130 = vadd.f32 %v934, %v1129
      %v1131 = vpop.f32.mrf.mxu0
      %1132 = vmatprep.mubr.f32.mxu0 0.0
      %1133 = vmatmul.mubr.f32.gmra.mxu0 %v1006
      %v1134 = vpop.f32.mrf.mxu0
      %v1135 = vadd.f32 %v939, %v1134
      %v1136 = vpop.f32.mrf.mxu0
      %1137 = vmatprep.mubr.f32.mxu0 0.0
      %1138 = vmatmul.mubr.f32.gmra.mxu0 %v1009
      %v1139 = vpop.f32.mrf.mxu0
      %v1140 = vadd.f32 %v944, %v1139
      %v1141 = vpop.f32.mrf.mxu0
      %1142 = vmatprep.mubr.f32.mxu0 0.0
      %1143 = vmatmul.mubr.f32.gmra.mxu0 %v1012
      %v1144 = vpop.f32.mrf.mxu0
      %v1145 = vadd.f32 %v949, %v1144
      %v1146 = vpop.f32.mrf.mxu0
      %1147 = vmatprep.mubr.f32.mxu0 0.0
      %1148 = vmatmul.mubr.f32.gmra.mxu0 %v1015
      %v1149 = vpop.f32.mrf.mxu0
      %v1150 = vadd.f32 %v954, %v1149
      %v1151 = vpop.f32.mrf.mxu0
      %1152 = vmatprep.mubr.f32.mxu0 0.0
      %1153 = vmatmul.mubr.f32.gmra.mxu0 %v1018
      %v1154 = vpop.f32.mrf.mxu0
      %v1155 = vadd.f32 %v959, %v1154
      %v1156 = vpop.f32.mrf.mxu0
      %1157 = vmatprep.mubr.f32.mxu0 0.0
      %1158 = vmatmul.mubr.f32.gmra.mxu0 %v1021
      %v1159 = vpop.f32.mrf.mxu0
      %v1160 = vadd.f32 %v964, %v1159
      %v1161 = vpop.f32.mrf.mxu0
      %1162 = vmatprep.mubr.f32.mxu0 0.0
      %1163 = vmatmul.mubr.f32.gmra.mxu0 %v1024
      %v1164 = vpop.f32.mrf.mxu0
      %v1165 = vadd.f32 %v969, %v1164
      %v1166 = vpop.f32.mrf.mxu0
      %1167 = vmatprep.mubr.f32.mxu0 0.0
      %1168 = vmatmul.mubr.f32.gmra.mxu0 %v1027
      %v1169 = vpop.f32.mrf.mxu0
      %v1170 = vadd.f32 %v974, %v1169
      %v1171 = vpop.f32.mrf.mxu0
      %1172 = vmatprep.mubr.f32.mxu0 0.0
      %1173 = vmatmul.mubr.f32.gmra.mxu0 %v1030
      %v1174 = vpop.f32.mrf.mxu0
      %v1175 = vadd.f32 %v979, %v1174
      %v1176 = vpop.f32.mrf.mxu0
      %1177 = vmatprep.mubr.f32.mxu0 0.0
      %1178 = vmatmul.mubr.f32.gmra.mxu0 %v1033
      %v1179 = vpop.f32.mrf.mxu0
      %v1180 = vadd.f32 %v984, %v1179
      %v1181 = vpop.f32.mrf.mxu0
      %1182 = vdwg.mxu0
      %v1184 = vlaneseq
      %v1185 = vshrl.u32 %v1184, 7
      %v1186 = vsub.s32 0, %v1185
      %v1187 = vrot.slane %v752, %v1186
      %v1189 = vadd.f32 %v1105, %v1187
      %v1190 = vadd.f32 %v1110, %v1187
      %v1191 = vadd.f32 %v1115, %v1187
      %v1192 = vadd.f32 %v1120, %v1187
      %v1193 = vadd.f32 %v1125, %v1187
      %v1194 = vadd.f32 %v1130, %v1187
      %v1195 = vadd.f32 %v1135, %v1187
      %v1196 = vadd.f32 %v1140, %v1187
      %v1197 = vadd.f32 %v1145, %v1187
      %v1198 = vadd.f32 %v1150, %v1187
      %v1199 = vadd.f32 %v1155, %v1187
      %v1200 = vadd.f32 %v1160, %v1187
      %v1201 = vadd.f32 %v1165, %v1187
      %v1202 = vadd.f32 %v1170, %v1187
      %v1203 = vadd.f32 %v1175, %v1187
      %v1204 = vadd.f32 %v1180, %v1187
      %1205 = vst.msk [vmem:[%s391] sm:$0xff] %vm642, %v1189
      %1206 = vst.msk [vmem:[%s391 + $0x8] sm:$0xff] %vm642, %v1190
      %1207 = vst.msk [vmem:[%s391 + $0x20] sm:$0xff] %vm642, %v1191
      %1208 = vst.msk [vmem:[%s391 + $0x28] sm:$0xff] %vm642, %v1192
      %1209 = vst.msk [vmem:[%s391 + $0x40] sm:$0xff] %vm642, %v1193
      %1210 = vst.msk [vmem:[%s391 + $0x48] sm:$0xff] %vm642, %v1194
      %1211 = vst.msk [vmem:[%s391 + $0x60] sm:$0xff] %vm642, %v1195
      %1212 = vst.msk [vmem:[%s391 + $0x68] sm:$0xff] %vm642, %v1196
      %1213 = vst.msk [vmem:[%s391 + $0x80] sm:$0xff] %vm642, %v1197
      %1214 = vst.msk [vmem:[%s391 + $0x88] sm:$0xff] %vm642, %v1198
      %1215 = vst.msk [vmem:[%s391 + $0xa0] sm:$0xff] %vm642, %v1199
      %1216 = vst.msk [vmem:[%s391 + $0xa8] sm:$0xff] %vm642, %v1200
      %1217 = vst.msk [vmem:[%s391 + $0xc0] sm:$0xff] %vm642, %v1201
      %1218 = vst.msk [vmem:[%s391 + $0xc8] sm:$0xff] %vm642, %v1202
      %1219 = vst.msk [vmem:[%s391 + $0xe0] sm:$0xff] %vm642, %v1203
      %1220 = vst.msk [vmem:[%s391 + $0xe8] sm:$0xff] %vm642, %v1204
      %v1221 = vld [vmem:[%s659] sm:$0xff]
      %v1222 = vld [vmem:[%s659 + $0x8] sm:$0xff]
      %v1223 = vld [vmem:[%s659 + $0x10] sm:$0xff]
      %v1224 = vld [vmem:[%s659 + $0x18] sm:$0xff]
      %v1225 = vld [vmem:[%s659 + $0x20] sm:$0xff]
      %v1226 = vld [vmem:[%s659 + $0x28] sm:$0xff]
      %v1227 = vld [vmem:[%s659 + $0x30] sm:$0xff]
      %v1228 = vld [vmem:[%s659 + $0x38] sm:$0xff]
      %v1229 = vld [vmem:[%s659 + $0x40] sm:$0xff]
      %v1230 = vld [vmem:[%s659 + $0x48] sm:$0xff]
      %v1231 = vld [vmem:[%s659 + $0x50] sm:$0xff]
      %v1232 = vld [vmem:[%s659 + $0x58] sm:$0xff]
      %v1233 = vld [vmem:[%s659 + $0x60] sm:$0xff]
      %v1234 = vld [vmem:[%s659 + $0x68] sm:$0xff]
      %v1235 = vld [vmem:[%s659 + $0x70] sm:$0xff]
      %v1236 = vld [vmem:[%s659 + $0x78] sm:$0xff]
      %s1237 = scalar_lea.vmem [#allocation2], 32
      %v1238 = vld [vmem:[%s1237] sm:$0xff]
      %v1239 = vld [vmem:[%s1237 + $0x8] sm:$0xff]
      %v1240 = vld [vmem:[%s1237 + $0x10] sm:$0xff]
      %v1241 = vld [vmem:[%s1237 + $0x18] sm:$0xff]
      %v1242 = vld [vmem:[%s1237 + $0x20] sm:$0xff]
      %v1243 = vld [vmem:[%s1237 + $0x28] sm:$0xff]
      %v1244 = vld [vmem:[%s1237 + $0x30] sm:$0xff]
      %v1245 = vld [vmem:[%s1237 + $0x38] sm:$0xff]
      %v1246 = vld [vmem:[%s1237 + $0x40] sm:$0xff]
      %v1247 = vld [vmem:[%s1237 + $0x48] sm:$0xff]
      %v1248 = vld [vmem:[%s1237 + $0x50] sm:$0xff]
      %v1249 = vld [vmem:[%s1237 + $0x58] sm:$0xff]
      %v1250 = vld [vmem:[%s1237 + $0x60] sm:$0xff]
      %v1251 = vld [vmem:[%s1237 + $0x68] sm:$0xff]
      %v1252 = vld [vmem:[%s1237 + $0x70] sm:$0xff]
      %v1253 = vld [vmem:[%s1237 + $0x78] sm:$0xff]
      %s1254 = scalar_lea.vmem %s3, 32
      %v1255 = vld [vmem:[%s1254] sm:$0xff]
      %v1256 = vld [vmem:[%s1254 + $0x8] sm:$0xf]
      %s1257 = scalar_lea.vmem %s3, 48
      %v1258 = vld [vmem:[%s1257] sm:$0xff]
      %v1259 = vld [vmem:[%s1257 + $0x8] sm:$0xf]
      %v1261 = vsel %vm660, %v1238, 0
      %v1264 = vsel %vm660, %v1239, 0
      %v1267 = vsel %vm660, %v1240, 0
      %v1270 = vsel %vm660, %v1241, 0
      %v1273 = vsel %vm660, %v1242, 0
      %v1276 = vsel %vm660, %v1243, 0
      %v1279 = vsel %vm660, %v1244, 0
      %v1282 = vsel %vm660, %v1245, 0
      %v1285 = vsel %vm660, %v1246, 0
      %v1288 = vsel %vm660, %v1247, 0
      %v1291 = vsel %vm660, %v1248, 0
      %v1294 = vsel %vm660, %v1249, 0
      %v1297 = vsel %vm660, %v1250, 0
      %v1300 = vsel %vm660, %v1251, 0
      %v1303 = vsel %vm660, %v1252, 0
      %v1306 = vsel %vm660, %v1253, 0
      %v1309 = vsel %vm838, %v1259, 0
      %1311 = vmatprep.subr.mxu0 0.0
      %1312 = vmatpush1.msra.mxu0 0.0
      %1313 = vmatprep.subr.mxu0 0.0
      %1314 = vmatpush1.msra.mxu0 0.0
      %1315 = vmatprep.subr.mxu0 0.0
      %1316 = vmatpush1.msra.mxu0 0.0
      %1317 = vmatprep.subr.mxu0 0.0
      %1318 = vmatpush1.msra.mxu0 0.0
      %1319 = vmatprep.subr.mxu0 0.0
      %1320 = vmatpush1.msra.mxu0 0.0
      %1321 = vmatprep.subr.mxu0 0.0
      %1322 = vmatpush1.msra.mxu0 0.0
      %1323 = vmatprep.subr.mxu0 0.0
      %1324 = vmatpush1.msra.mxu0 0.0
      %1325 = vmatprep.subr.mxu0 0.0
      %1326 = vmatpush1.msra.mxu0 0.0
      %1327 = vmatprep.subr.mxu0 0.0
      %1328 = vmatpush1.msra.mxu0 0.0
      %1329 = vmatprep.subr.mxu0 0.0
      %1330 = vmatpush1.msra.mxu0 0.0
      %1331 = vmatprep.subr.mxu0 0.0
      %1332 = vmatpush1.msra.mxu0 0.0
      %1333 = vmatprep.subr.mxu0 0.0
      %1334 = vmatpush1.msra.mxu0 0.0
      %1335 = vmatprep.subr.mxu0 0.0
      %1336 = vmatpush1.msra.mxu0 0.0
      %1337 = vmatprep.subr.mxu0 0.0
      %1338 = vmatpush1.msra.mxu0 0.0
      %1339 = vmatprep.subr.mxu0 0.0
      %1340 = vmatpush1.msra.mxu0 %v1309
      %1341 = vmatprep.subr.mxu0 0.0
      %1342 = vmatpush1.msra.mxu0 %v1258
      %1343 = vmatprep.subr.mxu0 0.0
      %1344 = vmatpush2.msra.mxu0 0.0
      %1345 = vmatprep.subr.mxu0 0.0
      %1346 = vmatpush2.msra.mxu0 0.0
      %1347 = vmatprep.subr.mxu0 0.0
      %1348 = vmatpush2.msra.mxu0 0.0
      %1349 = vmatprep.subr.mxu0 0.0
      %1350 = vmatpush2.msra.mxu0 0.0
      %1351 = vmatprep.subr.mxu0 0.0
      %1352 = vmatpush2.msra.mxu0 0.0
      %1353 = vmatprep.subr.mxu0 0.0
      %1354 = vmatpush2.msra.mxu0 0.0
      %1355 = vmatprep.subr.mxu0 0.0
      %1356 = vmatpush2.msra.mxu0 0.0
      %1357 = vmatprep.subr.mxu0 0.0
      %1358 = vmatpush2.msra.mxu0 0.0
      %1359 = vmatprep.subr.mxu0 0.0
      %1360 = vmatpush2.msra.mxu0 0.0
      %1361 = vmatprep.subr.mxu0 0.0
      %1362 = vmatpush2.msra.mxu0 0.0
      %1363 = vmatprep.subr.mxu0 0.0
      %1364 = vmatpush2.msra.mxu0 0.0
      %1365 = vmatprep.subr.mxu0 0.0
      %1366 = vmatpush2.msra.mxu0 0.0
      %1367 = vmatprep.subr.mxu0 0.0
      %1368 = vmatpush2.msra.mxu0 0.0
      %1369 = vmatprep.subr.mxu0 0.0
      %1370 = vmatpush2.msra.mxu0 0.0
      %1371 = vmatprep.subr.mxu0 0.0
      %1372 = vmatpush2.msra.mxu0 0.0
      %1373 = vmatprep.subr.mxu0 0.0
      %1374 = vmatpush2.msra.mxu0 0.0
      %1375 = vmatprep.mubr.f32.mxu0 0.0
      %1376 = vmatmul.mubr.f32.gmra.mxu0 %v1261
      %v1377 = vpop.f32.mrf.mxu0
      %v1378 = vadd.f32 0.0, %v1377
      %v1379 = vpop.f32.mrf.mxu0
      %1380 = vmatprep.mubr.f32.mxu0 0.0
      %1381 = vmatmul.mubr.f32.gmra.mxu0 %v1264
      %v1382 = vpop.f32.mrf.mxu0
      %v1383 = vadd.f32 0.0, %v1382
      %v1384 = vpop.f32.mrf.mxu0
      %1385 = vmatprep.mubr.f32.mxu0 0.0
      %1386 = vmatmul.mubr.f32.gmra.mxu0 %v1267
      %v1387 = vpop.f32.mrf.mxu0
      %v1388 = vadd.f32 0.0, %v1387
      %v1389 = vpop.f32.mrf.mxu0
      %1390 = vmatprep.mubr.f32.mxu0 0.0
      %1391 = vmatmul.mubr.f32.gmra.mxu0 %v1270
      %v1392 = vpop.f32.mrf.mxu0
      %v1393 = vadd.f32 0.0, %v1392
      %v1394 = vpop.f32.mrf.mxu0
      %1395 = vmatprep.mubr.f32.mxu0 0.0
      %1396 = vmatmul.mubr.f32.gmra.mxu0 %v1273
      %v1397 = vpop.f32.mrf.mxu0
      %v1398 = vadd.f32 0.0, %v1397
      %v1399 = vpop.f32.mrf.mxu0
      %1400 = vmatprep.mubr.f32.mxu0 0.0
      %1401 = vmatmul.mubr.f32.gmra.mxu0 %v1276
      %v1402 = vpop.f32.mrf.mxu0
      %v1403 = vadd.f32 0.0, %v1402
      %v1404 = vpop.f32.mrf.mxu0
      %1405 = vmatprep.mubr.f32.mxu0 0.0
      %1406 = vmatmul.mubr.f32.gmra.mxu0 %v1279
      %v1407 = vpop.f32.mrf.mxu0
      %v1408 = vadd.f32 0.0, %v1407
      %v1409 = vpop.f32.mrf.mxu0
      %1410 = vmatprep.mubr.f32.mxu0 0.0
      %1411 = vmatmul.mubr.f32.gmra.mxu0 %v1282
      %v1412 = vpop.f32.mrf.mxu0
      %v1413 = vadd.f32 0.0, %v1412
      %v1414 = vpop.f32.mrf.mxu0
      %1415 = vmatprep.mubr.f32.mxu0 0.0
      %1416 = vmatmul.mubr.f32.gmra.mxu0 %v1285
      %v1417 = vpop.f32.mrf.mxu0
      %v1418 = vadd.f32 0.0, %v1417
      %v1419 = vpop.f32.mrf.mxu0
      %1420 = vmatprep.mubr.f32.mxu0 0.0
      %1421 = vmatmul.mubr.f32.gmra.mxu0 %v1288
      %v1422 = vpop.f32.mrf.mxu0
      %v1423 = vadd.f32 0.0, %v1422
      %v1424 = vpop.f32.mrf.mxu0
      %1425 = vmatprep.mubr.f32.mxu0 0.0
      %1426 = vmatmul.mubr.f32.gmra.mxu0 %v1291
      %v1427 = vpop.f32.mrf.mxu0
      %v1428 = vadd.f32 0.0, %v1427
      %v1429 = vpop.f32.mrf.mxu0
      %1430 = vmatprep.mubr.f32.mxu0 0.0
      %1431 = vmatmul.mubr.f32.gmra.mxu0 %v1294
      %v1432 = vpop.f32.mrf.mxu0
      %v1433 = vadd.f32 0.0, %v1432
      %v1434 = vpop.f32.mrf.mxu0
      %1435 = vmatprep.mubr.f32.mxu0 0.0
      %1436 = vmatmul.mubr.f32.gmra.mxu0 %v1297
      %v1437 = vpop.f32.mrf.mxu0
      %v1438 = vadd.f32 0.0, %v1437
      %v1439 = vpop.f32.mrf.mxu0
      %1440 = vmatprep.mubr.f32.mxu0 0.0
      %1441 = vmatmul.mubr.f32.gmra.mxu0 %v1300
      %v1442 = vpop.f32.mrf.mxu0
      %v1443 = vadd.f32 0.0, %v1442
      %v1444 = vpop.f32.mrf.mxu0
      %1445 = vmatprep.mubr.f32.mxu0 0.0
      %1446 = vmatmul.mubr.f32.gmra.mxu0 %v1303
      %v1447 = vpop.f32.mrf.mxu0
      %v1448 = vadd.f32 0.0, %v1447
      %v1449 = vpop.f32.mrf.mxu0
      %1450 = vmatprep.mubr.f32.mxu0 0.0
      %1451 = vmatmul.mubr.f32.gmra.mxu0 %v1306
      %v1452 = vpop.f32.mrf.mxu0
      %v1453 = vadd.f32 0.0, %v1452
      %v1454 = vpop.f32.mrf.mxu0
      %1455 = vdwg.mxu0
      %v1457 = vsel %vm660, %v1221, 0
      %v1460 = vsel %vm660, %v1222, 0
      %v1463 = vsel %vm660, %v1223, 0
      %v1466 = vsel %vm660, %v1224, 0
      %v1469 = vsel %vm660, %v1225, 0
      %v1472 = vsel %vm660, %v1226, 0
      %v1475 = vsel %vm660, %v1227, 0
      %v1478 = vsel %vm660, %v1228, 0
      %v1481 = vsel %vm660, %v1229, 0
      %v1484 = vsel %vm660, %v1230, 0
      %v1487 = vsel %vm660, %v1231, 0
      %v1490 = vsel %vm660, %v1232, 0
      %v1493 = vsel %vm660, %v1233, 0
      %v1496 = vsel %vm660, %v1234, 0
      %v1499 = vsel %vm660, %v1235, 0
      %v1502 = vsel %vm660, %v1236, 0
      %v1505 = vsel %vm838, %v1256, 0
      %1507 = vmatprep.subr.mxu0 0.0
      %1508 = vmatpush1.msra.mxu0 0.0
      %1509 = vmatprep.subr.mxu0 0.0
      %1510 = vmatpush1.msra.mxu0 0.0
      %1511 = vmatprep.subr.mxu0 0.0
      %1512 = vmatpush1.msra.mxu0 0.0
      %1513 = vmatprep.subr.mxu0 0.0
      %1514 = vmatpush1.msra.mxu0 0.0
      %1515 = vmatprep.subr.mxu0 0.0
      %1516 = vmatpush1.msra.mxu0 0.0
      %1517 = vmatprep.subr.mxu0 0.0
      %1518 = vmatpush1.msra.mxu0 0.0
      %1519 = vmatprep.subr.mxu0 0.0
      %1520 = vmatpush1.msra.mxu0 0.0
      %1521 = vmatprep.subr.mxu0 0.0
      %1522 = vmatpush1.msra.mxu0 0.0
      %1523 = vmatprep.subr.mxu0 0.0
      %1524 = vmatpush1.msra.mxu0 0.0
      %1525 = vmatprep.subr.mxu0 0.0
      %1526 = vmatpush1.msra.mxu0 0.0
      %1527 = vmatprep.subr.mxu0 0.0
      %1528 = vmatpush1.msra.mxu0 0.0
      %1529 = vmatprep.subr.mxu0 0.0
      %1530 = vmatpush1.msra.mxu0 0.0
      %1531 = vmatprep.subr.mxu0 0.0
      %1532 = vmatpush1.msra.mxu0 0.0
      %1533 = vmatprep.subr.mxu0 0.0
      %1534 = vmatpush1.msra.mxu0 0.0
      %1535 = vmatprep.subr.mxu0 0.0
      %1536 = vmatpush1.msra.mxu0 %v1505
      %1537 = vmatprep.subr.mxu0 0.0
      %1538 = vmatpush1.msra.mxu0 %v1255
      %1539 = vmatprep.subr.mxu0 0.0
      %1540 = vmatpush2.msra.mxu0 0.0
      %1541 = vmatprep.subr.mxu0 0.0
      %1542 = vmatpush2.msra.mxu0 0.0
      %1543 = vmatprep.subr.mxu0 0.0
      %1544 = vmatpush2.msra.mxu0 0.0
      %1545 = vmatprep.subr.mxu0 0.0
      %1546 = vmatpush2.msra.mxu0 0.0
      %1547 = vmatprep.subr.mxu0 0.0
      %1548 = vmatpush2.msra.mxu0 0.0
      %1549 = vmatprep.subr.mxu0 0.0
      %1550 = vmatpush2.msra.mxu0 0.0
      %1551 = vmatprep.subr.mxu0 0.0
      %1552 = vmatpush2.msra.mxu0 0.0
      %1553 = vmatprep.subr.mxu0 0.0
      %1554 = vmatpush2.msra.mxu0 0.0
      %1555 = vmatprep.subr.mxu0 0.0
      %1556 = vmatpush2.msra.mxu0 0.0
      %1557 = vmatprep.subr.mxu0 0.0
      %1558 = vmatpush2.msra.mxu0 0.0
      %1559 = vmatprep.subr.mxu0 0.0
      %1560 = vmatpush2.msra.mxu0 0.0
      %1561 = vmatprep.subr.mxu0 0.0
      %1562 = vmatpush2.msra.mxu0 0.0
      %1563 = vmatprep.subr.mxu0 0.0
      %1564 = vmatpush2.msra.mxu0 0.0
      %1565 = vmatprep.subr.mxu0 0.0
      %1566 = vmatpush2.msra.mxu0 0.0
      %1567 = vmatprep.subr.mxu0 0.0
      %1568 = vmatpush2.msra.mxu0 0.0
      %1569 = vmatprep.subr.mxu0 0.0
      %1570 = vmatpush2.msra.mxu0 0.0
      %1571 = vmatprep.mubr.f32.mxu0 0.0
      %1572 = vmatmul.mubr.f32.gmra.mxu0 %v1457
      %v1573 = vpop.f32.mrf.mxu0
      %v1574 = vadd.f32 %v1378, %v1573
      %v1575 = vpop.f32.mrf.mxu0
      %1576 = vmatprep.mubr.f32.mxu0 0.0
      %1577 = vmatmul.mubr.f32.gmra.mxu0 %v1460
      %v1578 = vpop.f32.mrf.mxu0
      %v1579 = vadd.f32 %v1383, %v1578
      %v1580 = vpop.f32.mrf.mxu0
      %1581 = vmatprep.mubr.f32.mxu0 0.0
      %1582 = vmatmul.mubr.f32.gmra.mxu0 %v1463
      %v1583 = vpop.f32.mrf.mxu0
      %v1584 = vadd.f32 %v1388, %v1583
      %v1585 = vpop.f32.mrf.mxu0
      %1586 = vmatprep.mubr.f32.mxu0 0.0
      %1587 = vmatmul.mubr.f32.gmra.mxu0 %v1466
      %v1588 = vpop.f32.mrf.mxu0
      %v1589 = vadd.f32 %v1393, %v1588
      %v1590 = vpop.f32.mrf.mxu0
      %1591 = vmatprep.mubr.f32.mxu0 0.0
      %1592 = vmatmul.mubr.f32.gmra.mxu0 %v1469
      %v1593 = vpop.f32.mrf.mxu0
      %v1594 = vadd.f32 %v1398, %v1593
      %v1595 = vpop.f32.mrf.mxu0
      %1596 = vmatprep.mubr.f32.mxu0 0.0
      %1597 = vmatmul.mubr.f32.gmra.mxu0 %v1472
      %v1598 = vpop.f32.mrf.mxu0
      %v1599 = vadd.f32 %v1403, %v1598
      %v1600 = vpop.f32.mrf.mxu0
      %1601 = vmatprep.mubr.f32.mxu0 0.0
      %1602 = vmatmul.mubr.f32.gmra.mxu0 %v1475
      %v1603 = vpop.f32.mrf.mxu0
      %v1604 = vadd.f32 %v1408, %v1603
      %v1605 = vpop.f32.mrf.mxu0
      %1606 = vmatprep.mubr.f32.mxu0 0.0
      %1607 = vmatmul.mubr.f32.gmra.mxu0 %v1478
      %v1608 = vpop.f32.mrf.mxu0
      %v1609 = vadd.f32 %v1413, %v1608
      %v1610 = vpop.f32.mrf.mxu0
      %1611 = vmatprep.mubr.f32.mxu0 0.0
      %1612 = vmatmul.mubr.f32.gmra.mxu0 %v1481
      %v1613 = vpop.f32.mrf.mxu0
      %v1614 = vadd.f32 %v1418, %v1613
      %v1615 = vpop.f32.mrf.mxu0
      %1616 = vmatprep.mubr.f32.mxu0 0.0
      %1617 = vmatmul.mubr.f32.gmra.mxu0 %v1484
      %v1618 = vpop.f32.mrf.mxu0
      %v1619 = vadd.f32 %v1423, %v1618
      %v1620 = vpop.f32.mrf.mxu0
      %1621 = vmatprep.mubr.f32.mxu0 0.0
      %1622 = vmatmul.mubr.f32.gmra.mxu0 %v1487
      %v1623 = vpop.f32.mrf.mxu0
      %v1624 = vadd.f32 %v1428, %v1623
      %v1625 = vpop.f32.mrf.mxu0
      %1626 = vmatprep.mubr.f32.mxu0 0.0
      %1627 = vmatmul.mubr.f32.gmra.mxu0 %v1490
      %v1628 = vpop.f32.mrf.mxu0
      %v1629 = vadd.f32 %v1433, %v1628
      %v1630 = vpop.f32.mrf.mxu0
      %1631 = vmatprep.mubr.f32.mxu0 0.0
      %1632 = vmatmul.mubr.f32.gmra.mxu0 %v1493
      %v1633 = vpop.f32.mrf.mxu0
      %v1634 = vadd.f32 %v1438, %v1633
      %v1635 = vpop.f32.mrf.mxu0
      %1636 = vmatprep.mubr.f32.mxu0 0.0
      %1637 = vmatmul.mubr.f32.gmra.mxu0 %v1496
      %v1638 = vpop.f32.mrf.mxu0
      %v1639 = vadd.f32 %v1443, %v1638
      %v1640 = vpop.f32.mrf.mxu0
      %1641 = vmatprep.mubr.f32.mxu0 0.0
      %1642 = vmatmul.mubr.f32.gmra.mxu0 %v1499
      %v1643 = vpop.f32.mrf.mxu0
      %v1644 = vadd.f32 %v1448, %v1643
      %v1645 = vpop.f32.mrf.mxu0
      %1646 = vmatprep.mubr.f32.mxu0 0.0
      %1647 = vmatmul.mubr.f32.gmra.mxu0 %v1502
      %v1648 = vpop.f32.mrf.mxu0
      %v1649 = vadd.f32 %v1453, %v1648
      %v1650 = vpop.f32.mrf.mxu0
      %1651 = vdwg.mxu0
      %v1652 = vadd.f32 %v1574, %v1187
      %v1653 = vadd.f32 %v1579, %v1187
      %v1654 = vadd.f32 %v1584, %v1187
      %v1655 = vadd.f32 %v1589, %v1187
      %v1656 = vadd.f32 %v1594, %v1187
      %v1657 = vadd.f32 %v1599, %v1187
      %v1658 = vadd.f32 %v1604, %v1187
      %v1659 = vadd.f32 %v1609, %v1187
      %v1660 = vadd.f32 %v1614, %v1187
      %v1661 = vadd.f32 %v1619, %v1187
      %v1662 = vadd.f32 %v1624, %v1187
      %v1663 = vadd.f32 %v1629, %v1187
      %v1664 = vadd.f32 %v1634, %v1187
      %v1665 = vadd.f32 %v1639, %v1187
      %v1666 = vadd.f32 %v1644, %v1187
      %v1667 = vadd.f32 %v1649, %v1187
      %s1668 = scalar_lea.vmem %s391, 16
      %1669 = vst.msk [vmem:[%s1668] sm:$0xff] %vm642, %v1652
      %1670 = vst.msk [vmem:[%s1668 + $0x8] sm:$0xff] %vm642, %v1653
      %1671 = vst.msk [vmem:[%s1668 + $0x20] sm:$0xff] %vm642, %v1654
      %1672 = vst.msk [vmem:[%s1668 + $0x28] sm:$0xff] %vm642, %v1655
      %1673 = vst.msk [vmem:[%s1668 + $0x40] sm:$0xff] %vm642, %v1656
      %1674 = vst.msk [vmem:[%s1668 + $0x48] sm:$0xff] %vm642, %v1657
      %1675 = vst.msk [vmem:[%s1668 + $0x60] sm:$0xff] %vm642, %v1658
      %1676 = vst.msk [vmem:[%s1668 + $0x68] sm:$0xff] %vm642, %v1659
      %1677 = vst.msk [vmem:[%s1668 + $0x80] sm:$0xff] %vm642, %v1660
      %1678 = vst.msk [vmem:[%s1668 + $0x88] sm:$0xff] %vm642, %v1661
      %1679 = vst.msk [vmem:[%s1668 + $0xa0] sm:$0xff] %vm642, %v1662
      %1680 = vst.msk [vmem:[%s1668 + $0xa8] sm:$0xff] %vm642, %v1663
      %1681 = vst.msk [vmem:[%s1668 + $0xc0] sm:$0xff] %vm642, %v1664
      %1682 = vst.msk [vmem:[%s1668 + $0xc8] sm:$0xff] %vm642, %v1665
      %1683 = vst.msk [vmem:[%s1668 + $0xe0] sm:$0xff] %vm642, %v1666
      %1684 = vst.msk [vmem:[%s1668 + $0xe8] sm:$0xff] %vm642, %v1667
      %s1685 = smul.u32 8, %s21
      %p1686 = scmp.lt.s32.totalorder %s20, 1
      %s1687 = scalar_select %p1686, %s20, 1
      %p1688 = scmp.lt.s32.totalorder %s1685, 15
      %s1689 = scalar_select %p1688, %s1685, 15
      %s1690 = smul.addr %s1689, 4
      %s1691 = smul.addr %s1687, 64
      %s1692 = sadd.s32 %s1690, %s1691
      %s1693 = smul.addr %s1692, 8
      %s1694 = scalar_lea.vmem %s5, %s1693
      // Predicated region
      $region41: #{tpu_custom_call.1} parent=39 // pred_check
        %p1695 = pneg %p190
      $region42: #{tpu_custom_call.1} parent=39 // pred_check_branch
        %1697 = sbr.rel (%p1695) target = $region44
      $region43: #{tpu_custom_call.1} parent=39 // pred_region
        %s1698 = smul.u32 8, %s21
      $region44: #{tpu_custom_call.1} parent=39 // pred_fallthru
        _
    $region40: #{tpu_custom_call.1} parent=5 // pred_fallthru
      _
    %p1699 = scmp.le.s32.totalorder 2, %s11
    // Predicated region
    $region45: #{tpu_custom_call.1} parent=5 // pred_check
      %p1700 = pneg %p1699
    $region46: #{tpu_custom_call.1} parent=5 // pred_check_branch
      %1702 = sbr.rel (%p1700) target = $region48
    $region47: #{tpu_custom_call.1} parent=5 // pred_region
      %s1703 = ssub.s32 %s11, 2
      // Predicated region
      $region49: #{tpu_custom_call.1} parent=47 // pred_check
        %p1704 = pneg %p196
      $region50: #{tpu_custom_call.1} parent=47 // pred_check_branch
        %1706 = sbr.rel (%p1704) target = $region52
      $region51: #{tpu_custom_call.1} parent=47 // pred_region
        %s1707 = smul.u32 8, %s23
        %p1708 = scmp.lt.s32.totalorder %s22, 1
        %s1709 = scalar_select %p1708, %s22, 1
        %p1710 = scmp.lt.s32.totalorder %s1707, 15
        %s1711 = scalar_select %p1710, %s1707, 15
        %s1712 = smul.addr %s1711, 4
        %s1713 = smul.addr %s1709, 64
        %s1714 = sadd.s32 %s1712, %s1713
        %s1715 = smul.addr %s1714, 8
        %s1716 = scalar_lea.vmem %s5, %s1715
      $region52: #{tpu_custom_call.1} parent=47 // pred_fallthru
        _
    $region48: #{tpu_custom_call.1} parent=5 // pred_fallthru
      _
  $region6: #{tpu_custom_call.1} parent=0 // loop_footer
    %s15 = sadd.s32 1, %s11
  $region7: #{tpu_custom_call.1} parent=0 // loop_footer_branch
    %10 = sbr.rel target = $region3
  $region8: #{tpu_custom_call.1} parent=0 // loop_exit
    _

</llo_original>
